<compile_context>
chip_gen: v5e
topology: v5e:2x2
jax: 0.10.0
libtpu: 0.0.40
codegen_flags: <defaults>
</compile_context>

<pallas_src>
import math

import jax
import jax.numpy as jnp
from jax.experimental import pallas as pl
from jax.experimental.pallas import tpu as pltpu

# ----------------------------- config (small, synthetic) --------------------
B = 2            # batch
L = 8            # max_length / sequence length
D = 32           # hidden_size (d_model)
NHEAD = 2        # args.nhead
NLAYERS = 2      # args.nlayers
ITEM_SIZE = 64   # args.item_size
DH = D // NHEAD

VMEM = pl.BlockSpec(memory_space=pltpu.MemorySpace.VMEM)


# ----------------------------- in-kernel helpers -----------------------------
def _ln(x, w, b, eps):
    # matches custom LayerNorm (eps=1e-12) and nn.LayerNorm (eps=1e-5):
    # (x - mean) / sqrt(biased_var + eps) * w + b
    u = jnp.mean(x, axis=-1, keepdims=True)
    s = jnp.mean((x - u) ** 2, axis=-1, keepdims=True)
    return w * ((x - u) * jax.lax.rsqrt(s + eps)) + b


def _softmax_lastdim(x):
    x = x - jnp.max(x, axis=-1, keepdims=True)
    e = jnp.exp(x)
    # EUP reciprocal instead of a VPU divide (keeps the single EUP slot cheap).
    return e * pl.reciprocal(jnp.sum(e, axis=-1, keepdims=True), approx=True)


# ----------------------------- fused kernel ----------------------------------
def exposure_fused_kernel(sas_x_ref, kbias_ref, ln_io_ref,
                          w_qkv_ref, b_qkv_ref, w_mats_ref, misc_ref,
                          gru_x_ref, w_gru_ref, seqlen_ref,
                          o_ref):
    """Whole ExposureModel ('mix') forward in one invocation.

    sas_x_ref : [B*L, D]   token+position embeddings, batch-major rows (b*L + l)
    kbias_ref : [B, 1, L]  additive key-padding bias (0 or -1e9)
    ln_io_ref : [4, D]     rows: emb_ln_w, emb_ln_b, final_ln_w, final_ln_b
    w_qkv_ref : [NL, D, 3D]   transposed in_proj weights
    b_qkv_ref : [NL, 1, 3D]   in_proj biases
    w_mats_ref: [NL, 3D, D]   rows [0:D]=out_w, [D:2D]=ff1_w, [2D:3D]=ff2_w (transposed)
    misc_ref  : [NL, 8, D]    rows: out_b, ff1_b, ff2_b, ln1_w, ln1_b, ln2_w, ln2_b, pad
    gru_x_ref : [L*B, D]   GRU token embeddings, time-major rows (t*B + b)
    w_gru_ref : [2, D, 3D] row0 = W_ih^T, row1 = W_hh^T (gate order r, z, n)
    seqlen_ref: [B, 1] int32
    o_ref     : [2B, D]    rows [0:B] = sas_out, rows [B:2B] = gru_out
    """
    scale = 1.0 / math.sqrt(DH)

    # ============================ SASRec branch ============================
    x = _ln(sas_x_ref[...], ln_io_ref[0:1, :], ln_io_ref[1:2, :], 1e-12)   # [B*L, D]
    kbias = kbias_ref[...]                                                 # [B, 1, L]

    for li in range(NLAYERS):                       # static unroll, NLAYERS = 2
        w_qkv = w_qkv_ref[li]                       # [D, 3D]
        b_qkv = b_qkv_ref[li]                       # [1, 3D]
        w_slab = w_mats_ref[li]                     # [3D, D]
        misc = misc_ref[li]                         # [8, D]

        w_out = w_slab[0 * D:1 * D, :]
        w_ff1 = w_slab[1 * D:2 * D, :]
        w_ff2 = w_slab[2 * D:3 * D, :]
        b_out = misc[0:1, :]
        b_ff1 = misc[1:2, :]
        b_ff2 = misc[2:3, :]
        ln1_w = misc[3:4, :]
        ln1_b = misc[4:5, :]
        ln2_w = misc[5:6, :]
        ln2_b = misc[6:7, :]

        # ---- self attention (MultiheadAttention, post-norm encoder layer) ----
        qkv = jnp.dot(x, w_qkv, preferred_element_type=jnp.float32) + b_qkv   # [B*L, 3D]
        q = qkv[:, 0 * D:1 * D].reshape(B, L, D)
        k = qkv[:, 1 * D:2 * D].reshape(B, L, D)
        v = qkv[:, 2 * D:3 * D].reshape(B, L, D)

        heads = []
        for h in range(NHEAD):                      # static unroll, batched over B
            hs = slice(h * DH, (h + 1) * DH)
            s = jnp.einsum('bld,bmd->blm', q[:, :, hs], k[:, :, hs],
                           preferred_element_type=jnp.float32) * scale        # [B, L, L]
            p = _softmax_lastdim(s + kbias)          # mask padded keys
            heads.append(jnp.einsum('blm,bmd->bld', p, v[:, :, hs],
                                    preferred_element_type=jnp.float32))      # [B, L, DH]
        ctx = jnp.concatenate(heads, axis=-1).reshape(B * L, D)
        attn = jnp.dot(ctx, w_out, preferred_element_type=jnp.float32) + b_out

        # residual + norm1
        x1 = _ln(x + attn, ln1_w, ln1_b, 1e-5)

        # feed forward (relu), residual + norm2
        ff = jnp.maximum(
            jnp.dot(x1, w_ff1, preferred_element_type=jnp.float32) + b_ff1, 0.0)
        ff = jnp.dot(ff, w_ff2, preferred_element_type=jnp.float32) + b_ff2
        x = _ln(x1 + ff, ln2_w, ln2_b, 1e-5)

    # TransformerEncoder final norm, then take the last position of each sequence.
    x = _ln(x, ln_io_ref[2:3, :], ln_io_ref[3:4, :], 1e-5)
    sas_out = jnp.concatenate(
        [x[b * L + L - 1: b * L + L, :] for b in range(B)], axis=0)            # [B, D]

    # ============================ GRU4Rec branch ============================
    gx = gru_x_ref[...]                              # [L*B, D] time-major
    wih = w_gru_ref[0]                               # [D, 3D]
    whh = w_gru_ref[1]                               # [D, 3D]
    sl = seqlen_ref[...]                             # [B, 1] int32

    # Input projection hoisted off the serial recurrence (no h dependence).
    gi_all = jnp.dot(gx, wih, preferred_element_type=jnp.float32)              # [L*B, 3D]

    h = jnp.zeros((B, D), jnp.float32)
    for t in range(L):                               # static unroll (L = 8)
        gi = gi_all[t * B:(t + 1) * B, :]            # [B, 3D]
        gh = jnp.dot(h, whh, preferred_element_type=jnp.float32)               # [B, 3D]
        r = jax.nn.sigmoid(gi[:, 0 * D:1 * D] + gh[:, 0 * D:1 * D])
        z = jax.nn.sigmoid(gi[:, 1 * D:2 * D] + gh[:, 1 * D:2 * D])
        n = jnp.tanh(gi[:, 2 * D:3 * D] + r * gh[:, 2 * D:3 * D])
        h_new = (1.0 - z) * n + z * h
        # freeze past each sequence's true length (== pack_padded_sequence hidden)
        h = jnp.where(sl > t, h_new, h)

    o_ref[0:B, :] = sas_out
    o_ref[B:2 * B, :] = h


# ----------------------------- pallas_call wrapper ----------------------------
def exposure_pallas(sas_x, kbias, ln_io, w_qkv, b_qkv, w_mats, misc,
                    gru_x, w_gru, seq_len):
    out = pl.pallas_call(
        exposure_fused_kernel,
        out_shape=jax.ShapeDtypeStruct((2 * B, D), jnp.float32),
        in_specs=[VMEM] * 10,
        out_specs=VMEM,
    )(sas_x, kbias, ln_io, w_qkv, b_qkv, w_mats, misc, gru_x, w_gru, seq_len)
    return out[:B], out[B:]


# ----------------------------- parameters -------------------------------------
def init_params(key):
    ks = jax.random.split(key, 6 + 3 * NLAYERS)

    def nrm(k, shape, std=0.02):
        return (std * jax.random.normal(k, shape)).astype(jnp.float32)

    p = {
        'sas_tok_emb': nrm(ks[0], (ITEM_SIZE, D)),
        'sas_pos_emb': nrm(ks[1], (L, D)),
        'gru_tok_emb': nrm(ks[2], (ITEM_SIZE, D)),
        # rows: emb_ln_w, emb_ln_b, final_ln_w, final_ln_b
        'ln_io': jnp.stack([jnp.ones(D), jnp.zeros(D),
                            jnp.ones(D), jnp.zeros(D)]).astype(jnp.float32),
    }

    w_qkv, b_qkv, w_mats, misc = [], [], [], []
    for li in range(NLAYERS):
        k = jax.random.split(ks[3 + li], 4)
        w_qkv.append(nrm(k[0], (D, 3 * D)))                      # in_proj_weight^T
        b_qkv.append(jnp.zeros((1, 3 * D), jnp.float32))         # in_proj_bias
        w_mats.append(jnp.concatenate([nrm(k[1], (D, D)),        # out_proj.weight^T
                                       nrm(k[2], (D, D)),        # linear1.weight^T
                                       nrm(k[3], (D, D))],       # linear2.weight^T
                                      axis=0))                   # [3D, D]
        misc.append(jnp.stack([
            jnp.zeros(D),   # out_proj.bias
            jnp.zeros(D),   # linear1.bias
            jnp.zeros(D),   # linear2.bias
            jnp.ones(D),    # ln1.weight
            jnp.zeros(D),   # ln1.bias
            jnp.ones(D),    # ln2.weight
            jnp.zeros(D),   # ln2.bias
            jnp.zeros(D),   # pad
        ]).astype(jnp.float32))
    p['w_qkv'] = jnp.stack(w_qkv)          # [NL, D, 3D]
    p['b_qkv'] = jnp.stack(b_qkv)          # [NL, 1, 3D]
    p['w_mats'] = jnp.stack(w_mats)        # [NL, 3D, D]
    p['misc'] = jnp.stack(misc)            # [NL, 8, D]
    # GRU (bias=False), transposed weights, gate order r,z,n: [2, D, 3D]
    p['w_gru'] = jnp.stack([nrm(ks[3 + NLAYERS], (D, 3 * D), std=0.1),   # W_ih^T
                            nrm(ks[4 + NLAYERS], (D, 3 * D), std=0.1)])  # W_hh^T
    return p


# ----------------------------- ExposureModel.forward ('mix') ------------------
@jax.jit
def exposure_model_forward(params, sasrec_input_ids, seq_position, gru_input_ids, seq_len):
    # SASRec embedding (token + position), flattened batch-major for the kernel.
    tok = params['sas_tok_emb'][sasrec_input_ids]                 # [B, L, D]
    pos = params['sas_pos_emb'][seq_position]                     # [B, L, D]
    sas_x = (tok + pos).reshape(B * L, D)

    # key_padding_mask: True where token == pad(0) -> additive -1e9 bias on keys.
    kbias = jnp.where(sasrec_input_ids == 0, -1e9, 0.0).astype(jnp.float32).reshape(B, 1, L)

    # GRU embeddings, time-major flattened (row = t*B + b); seq_len as [B,1] scalars.
    g = params['gru_tok_emb'][gru_input_ids]                      # [B, L, D]
    gru_x = jnp.transpose(g, (1, 0, 2)).reshape(L * B, D)
    sl = seq_len.astype(jnp.int32).reshape(B, 1)

    sas_out, gru_out = exposure_pallas(
        sas_x, kbias, params['ln_io'], params['w_qkv'], params['b_qkv'],
        params['w_mats'], params['misc'], gru_x, params['w_gru'], sl)
    return sas_out, gru_out


# ----------------------------- main --------------------------------------------
if __name__ == "__main__":
    key = jax.random.PRNGKey(0)
    kp, k1, k2 = jax.random.split(key, 3)
    params = init_params(kp)

    sasrec_input_ids = jax.random.randint(k1, (B, L), 1, ITEM_SIZE, dtype=jnp.int32)
    sasrec_input_ids = sasrec_input_ids.at[0, 0].set(0)   # one pad token to exercise the mask
    seq_position = jnp.broadcast_to(jnp.arange(L, dtype=jnp.int32), (B, L))
    gru_input_ids = jax.random.randint(k2, (B, L), 1, ITEM_SIZE, dtype=jnp.int32)
    seq_len = jnp.array([L, L // 2], dtype=jnp.int32)

    sas_out, gru_out = exposure_model_forward(
        params, sasrec_input_ids, seq_position, gru_input_ids, seq_len)
    jax.block_until_ready((sas_out, gru_out))

    assert sas_out.shape == (B, D) and gru_out.shape == (B, D)
    assert bool(jnp.all(jnp.isfinite(sas_out))) and bool(jnp.all(jnp.isfinite(gru_out)))
    print("KERNEL_OK")
</pallas_src>

<mosaic_0001>
module attributes {stable_mosaic.version = 11 : i64} {
  func.func @exposure_fused_kernel(%arg0: memref<16x32xf32, #tpu.memory_space<vmem>>, %arg1: memref<2x1x8xf32, #tpu.memory_space<vmem>>, %arg2: memref<4x32xf32, #tpu.memory_space<vmem>>, %arg3: memref<2x32x96xf32, #tpu.memory_space<vmem>>, %arg4: memref<2x1x96xf32, #tpu.memory_space<vmem>>, %arg5: memref<2x96x32xf32, #tpu.memory_space<vmem>>, %arg6: memref<2x8x32xf32, #tpu.memory_space<vmem>>, %arg7: memref<16x32xf32, #tpu.memory_space<vmem>>, %arg8: memref<2x32x96xf32, #tpu.memory_space<vmem>>, %arg9: memref<2x1xi32, #tpu.memory_space<vmem>>, %arg10: memref<4x32xf32, #tpu.memory_space<vmem>>) attributes {dimension_semantics = [], scalar_prefetch = 0 : i64, scratch_operands = 0 : i64, tpu.core_type = #tpu.core_type<tc>} {
    %c0 = arith.constant 0 : index
    %c0_0 = arith.constant 0 : index
    %0 = vector.load %arg0[%c0, %c0_0] : memref<16x32xf32, #tpu.memory_space<vmem>>, vector<16x32xf32>
    %c0_1 = arith.constant 0 : index
    %c0_2 = arith.constant 0 : index
    %1 = vector.load %arg2[%c0_1, %c0_2] : memref<4x32xf32, #tpu.memory_space<vmem>>, vector<1x32xf32>
    %c1 = arith.constant 1 : index
    %c0_3 = arith.constant 0 : index
    %2 = vector.load %arg2[%c1, %c0_3] : memref<4x32xf32, #tpu.memory_space<vmem>>, vector<1x32xf32>
    %cst = arith.constant dense<0.000000e+00> : vector<16xf32>
    %3 = vector.multi_reduction <add>, %0, %cst [1] : vector<16x32xf32> to vector<16xf32>
    %4 = vector.shape_cast %3 : vector<16xf32> to vector<16x1xf32>
    %cst_4 = arith.constant 3.200000e+01 : f32
    %5 = vector.broadcast %cst_4 : f32 to vector<16x1xf32>
    %6 = arith.divf %4, %5 : vector<16x1xf32>
    %7 = vector.broadcast %6 : vector<16x1xf32> to vector<16x32xf32>
    %8 = arith.subf %0, %7 : vector<16x32xf32>
    %9 = arith.mulf %8, %8 : vector<16x32xf32>
    %cst_5 = arith.constant dense<0.000000e+00> : vector<16xf32>
    %10 = vector.multi_reduction <add>, %9, %cst_5 [1] : vector<16x32xf32> to vector<16xf32>
    %11 = vector.shape_cast %10 : vector<16xf32> to vector<16x1xf32>
    %cst_6 = arith.constant 3.200000e+01 : f32
    %12 = vector.broadcast %cst_6 : f32 to vector<16x1xf32>
    %13 = arith.divf %11, %12 : vector<16x1xf32>
    %14 = vector.broadcast %6 : vector<16x1xf32> to vector<16x32xf32>
    %15 = arith.subf %0, %14 : vector<16x32xf32>
    %cst_7 = arith.constant 9.99999996E-13 : f32
    %16 = vector.broadcast %cst_7 : f32 to vector<16x1xf32>
    %17 = arith.addf %13, %16 : vector<16x1xf32>
    %18 = math.rsqrt %17 : vector<16x1xf32>
    %19 = vector.broadcast %18 : vector<16x1xf32> to vector<16x32xf32>
    %20 = arith.mulf %15, %19 : vector<16x32xf32>
    %21 = vector.broadcast %1 : vector<1x32xf32> to vector<16x32xf32>
    %22 = arith.mulf %21, %20 : vector<16x32xf32>
    %23 = vector.broadcast %2 : vector<1x32xf32> to vector<16x32xf32>
    %24 = arith.addf %22, %23 : vector<16x32xf32>
    %c0_8 = arith.constant 0 : index
    %c0_9 = arith.constant 0 : index
    %c0_10 = arith.constant 0 : index
    %25 = vector.load %arg1[%c0_8, %c0_9, %c0_10] : memref<2x1x8xf32, #tpu.memory_space<vmem>>, vector<2x1x8xf32>
    %c0_11 = arith.constant 0 : index
    %c0_12 = arith.constant 0 : index
    %c0_13 = arith.constant 0 : index
    %26 = vector.load %arg3[%c0_11, %c0_12, %c0_13] : memref<2x32x96xf32, #tpu.memory_space<vmem>>, vector<1x32x96xf32>
    %27 = vector.shape_cast %26 : vector<1x32x96xf32> to vector<32x96xf32>
    %c0_14 = arith.constant 0 : index
    %c0_15 = arith.constant 0 : index
    %c0_16 = arith.constant 0 : index
    %28 = vector.load %arg4[%c0_14, %c0_15, %c0_16] : memref<2x1x96xf32, #tpu.memory_space<vmem>>, vector<1x1x96xf32>
    %29 = vector.shape_cast %28 : vector<1x1x96xf32> to vector<1x96xf32>
    %c0_17 = arith.constant 0 : index
    %c0_18 = arith.constant 0 : index
    %c0_19 = arith.constant 0 : index
    %30 = vector.load %arg5[%c0_17, %c0_18, %c0_19] : memref<2x96x32xf32, #tpu.memory_space<vmem>>, vector<1x96x32xf32>
    %31 = vector.shape_cast %30 : vector<1x96x32xf32> to vector<96x32xf32>
    %c0_20 = arith.constant 0 : index
    %c0_21 = arith.constant 0 : index
    %c0_22 = arith.constant 0 : index
    %32 = vector.load %arg6[%c0_20, %c0_21, %c0_22] : memref<2x8x32xf32, #tpu.memory_space<vmem>>, vector<1x8x32xf32>
    %33 = vector.shape_cast %32 : vector<1x8x32xf32> to vector<8x32xf32>
    %34 = vector.extract_strided_slice %31 {offsets = [0, 0], sizes = [32, 32], strides = [1, 1]} : vector<96x32xf32> to vector<32x32xf32>
    %35 = vector.extract_strided_slice %31 {offsets = [32, 0], sizes = [32, 32], strides = [1, 1]} : vector<96x32xf32> to vector<32x32xf32>
    %36 = vector.extract_strided_slice %31 {offsets = [64, 0], sizes = [32, 32], strides = [1, 1]} : vector<96x32xf32> to vector<32x32xf32>
    %37 = vector.extract_strided_slice %33 {offsets = [0, 0], sizes = [1, 32], strides = [1, 1]} : vector<8x32xf32> to vector<1x32xf32>
    %38 = vector.extract_strided_slice %33 {offsets = [1, 0], sizes = [1, 32], strides = [1, 1]} : vector<8x32xf32> to vector<1x32xf32>
    %39 = vector.extract_strided_slice %33 {offsets = [2, 0], sizes = [1, 32], strides = [1, 1]} : vector<8x32xf32> to vector<1x32xf32>
    %40 = vector.extract_strided_slice %33 {offsets = [3, 0], sizes = [1, 32], strides = [1, 1]} : vector<8x32xf32> to vector<1x32xf32>
    %41 = vector.extract_strided_slice %33 {offsets = [4, 0], sizes = [1, 32], strides = [1, 1]} : vector<8x32xf32> to vector<1x32xf32>
    %42 = vector.extract_strided_slice %33 {offsets = [5, 0], sizes = [1, 32], strides = [1, 1]} : vector<8x32xf32> to vector<1x32xf32>
    %43 = vector.extract_strided_slice %33 {offsets = [6, 0], sizes = [1, 32], strides = [1, 1]} : vector<8x32xf32> to vector<1x32xf32>
    %cst_23 = arith.constant dense<0.000000e+00> : vector<16x96xf32>
    %44 = tpu.matmul %24, %27, %cst_23 {dimension_numbers = #tpu.dot_dimension_numbers<[1], [0], [0], [1], [0, 0, 1, 1], [], []>} : vector<16x32xf32>, vector<32x96xf32>, vector<16x96xf32> -> vector<16x96xf32>
    %45 = vector.broadcast %29 : vector<1x96xf32> to vector<16x96xf32>
    %46 = arith.addf %44, %45 : vector<16x96xf32>
    %47 = vector.extract_strided_slice %46 {offsets = [0, 0], sizes = [16, 32], strides = [1, 1]} : vector<16x96xf32> to vector<16x32xf32>
    %48 = vector.shape_cast %47 : vector<16x32xf32> to vector<2x8x32xf32>
    %49 = vector.extract_strided_slice %46 {offsets = [0, 32], sizes = [16, 32], strides = [1, 1]} : vector<16x96xf32> to vector<16x32xf32>
    %50 = vector.shape_cast %49 : vector<16x32xf32> to vector<2x8x32xf32>
    %51 = vector.extract_strided_slice %46 {offsets = [0, 64], sizes = [16, 32], strides = [1, 1]} : vector<16x96xf32> to vector<16x32xf32>
    %52 = vector.shape_cast %51 : vector<16x32xf32> to vector<2x8x32xf32>
    %53 = vector.extract_strided_slice %48 {offsets = [0, 0, 0], sizes = [2, 8, 16], strides = [1, 1, 1]} : vector<2x8x32xf32> to vector<2x8x16xf32>
    %54 = vector.extract_strided_slice %50 {offsets = [0, 0, 0], sizes = [2, 8, 16], strides = [1, 1, 1]} : vector<2x8x32xf32> to vector<2x8x16xf32>
    "tpu.trace_start"() <{level = 10 : i32, message = "bld,bmd->blm"}> : () -> ()
    %cst_24 = arith.constant dense<0.000000e+00> : vector<2x8x8xf32>
    %55 = tpu.matmul %53, %54, %cst_24 {dimension_numbers = #tpu.dot_dimension_numbers<[2], [2], [1], [1], [0, 0, 0, 1, 1, 1], [0], [0]>} : vector<2x8x16xf32>, vector<2x8x16xf32>, vector<2x8x8xf32> -> vector<2x8x8xf32>
    "tpu.trace_stop"() : () -> ()
    %cst_25 = arith.constant 2.500000e-01 : f32
    %56 = vector.broadcast %cst_25 : f32 to vector<2x8x8xf32>
    %57 = arith.mulf %55, %56 : vector<2x8x8xf32>
    %58 = vector.broadcast %25 : vector<2x1x8xf32> to vector<2x8x8xf32>
    %59 = arith.addf %57, %58 : vector<2x8x8xf32>
    %cst_26 = arith.constant dense<0xFF800000> : vector<2x8xf32>
    %60 = vector.multi_reduction <maximumf>, %59, %cst_26 [2] : vector<2x8x8xf32> to vector<2x8xf32>
    %61 = vector.shape_cast %60 : vector<2x8xf32> to vector<2x8x1xf32>
    %62 = vector.broadcast %61 : vector<2x8x1xf32> to vector<2x8x8xf32>
    %63 = arith.subf %59, %62 : vector<2x8x8xf32>
    %64 = math.exp %63 : vector<2x8x8xf32>
    %cst_27 = arith.constant dense<0.000000e+00> : vector<2x8xf32>
    %65 = vector.multi_reduction <add>, %64, %cst_27 [2] : vector<2x8x8xf32> to vector<2x8xf32>
    %66 = vector.shape_cast %65 : vector<2x8xf32> to vector<2x8x1xf32>
    %67 = tpu.reciprocal %66 {approx = true} : vector<2x8x1xf32> -> vector<2x8x1xf32>
    %68 = vector.broadcast %67 : vector<2x8x1xf32> to vector<2x8x8xf32>
    %69 = arith.mulf %64, %68 : vector<2x8x8xf32>
    %70 = vector.extract_strided_slice %52 {offsets = [0, 0, 0], sizes = [2, 8, 16], strides = [1, 1, 1]} : vector<2x8x32xf32> to vector<2x8x16xf32>
    "tpu.trace_start"() <{level = 10 : i32, message = "blm,bmd->bld"}> : () -> ()
    %cst_28 = arith.constant dense<0.000000e+00> : vector<2x8x16xf32>
    %71 = tpu.matmul %69, %70, %cst_28 {dimension_numbers = #tpu.dot_dimension_numbers<[2], [1], [1], [2], [0, 0, 0, 1, 1, 2], [0], [0]>} : vector<2x8x8xf32>, vector<2x8x16xf32>, vector<2x8x16xf32> -> vector<2x8x16xf32>
    "tpu.trace_stop"() : () -> ()
    %72 = vector.extract_strided_slice %48 {offsets = [0, 0, 16], sizes = [2, 8, 16], strides = [1, 1, 1]} : vector<2x8x32xf32> to vector<2x8x16xf32>
    %73 = vector.extract_strided_slice %50 {offsets = [0, 0, 16], sizes = [2, 8, 16], strides = [1, 1, 1]} : vector<2x8x32xf32> to vector<2x8x16xf32>
    "tpu.trace_start"() <{level = 10 : i32, message = "bld,bmd->blm"}> : () -> ()
    %cst_29 = arith.constant dense<0.000000e+00> : vector<2x8x8xf32>
    %74 = tpu.matmul %72, %73, %cst_29 {dimension_numbers = #tpu.dot_dimension_numbers<[2], [2], [1], [1], [0, 0, 0, 1, 1, 1], [0], [0]>} : vector<2x8x16xf32>, vector<2x8x16xf32>, vector<2x8x8xf32> -> vector<2x8x8xf32>
    "tpu.trace_stop"() : () -> ()
    %cst_30 = arith.constant 2.500000e-01 : f32
    %75 = vector.broadcast %cst_30 : f32 to vector<2x8x8xf32>
    %76 = arith.mulf %74, %75 : vector<2x8x8xf32>
    %77 = vector.broadcast %25 : vector<2x1x8xf32> to vector<2x8x8xf32>
    %78 = arith.addf %76, %77 : vector<2x8x8xf32>
    %cst_31 = arith.constant dense<0xFF800000> : vector<2x8xf32>
    %79 = vector.multi_reduction <maximumf>, %78, %cst_31 [2] : vector<2x8x8xf32> to vector<2x8xf32>
    %80 = vector.shape_cast %79 : vector<2x8xf32> to vector<2x8x1xf32>
    %81 = vector.broadcast %80 : vector<2x8x1xf32> to vector<2x8x8xf32>
    %82 = arith.subf %78, %81 : vector<2x8x8xf32>
    %83 = math.exp %82 : vector<2x8x8xf32>
    %cst_32 = arith.constant dense<0.000000e+00> : vector<2x8xf32>
    %84 = vector.multi_reduction <add>, %83, %cst_32 [2] : vector<2x8x8xf32> to vector<2x8xf32>
    %85 = vector.shape_cast %84 : vector<2x8xf32> to vector<2x8x1xf32>
    %86 = tpu.reciprocal %85 {approx = true} : vector<2x8x1xf32> -> vector<2x8x1xf32>
    %87 = vector.broadcast %86 : vector<2x8x1xf32> to vector<2x8x8xf32>
    %88 = arith.mulf %83, %87 : vector<2x8x8xf32>
    %89 = vector.extract_strided_slice %52 {offsets = [0, 0, 16], sizes = [2, 8, 16], strides = [1, 1, 1]} : vector<2x8x32xf32> to vector<2x8x16xf32>
    "tpu.trace_start"() <{level = 10 : i32, message = "blm,bmd->bld"}> : () -> ()
    %cst_33 = arith.constant dense<0.000000e+00> : vector<2x8x16xf32>
    %90 = tpu.matmul %88, %89, %cst_33 {dimension_numbers = #tpu.dot_dimension_numbers<[2], [1], [1], [2], [0, 0, 0, 1, 1, 2], [0], [0]>} : vector<2x8x8xf32>, vector<2x8x16xf32>, vector<2x8x16xf32> -> vector<2x8x16xf32>
    "tpu.trace_stop"() : () -> ()
    %91 = tpu.concatenate %71, %90 in 2 : vector<2x8x16xf32>, vector<2x8x16xf32> -> vector<2x8x32xf32>
    %92 = vector.shape_cast %91 : vector<2x8x32xf32> to vector<16x32xf32>
    %cst_34 = arith.constant dense<0.000000e+00> : vector<16x32xf32>
    %93 = tpu.matmul %92, %34, %cst_34 {dimension_numbers = #tpu.dot_dimension_numbers<[1], [0], [0], [1], [0, 0, 1, 1], [], []>} : vector<16x32xf32>, vector<32x32xf32>, vector<16x32xf32> -> vector<16x32xf32>
    %94 = vector.broadcast %37 : vector<1x32xf32> to vector<16x32xf32>
    %95 = arith.addf %93, %94 : vector<16x32xf32>
    %96 = arith.addf %24, %95 : vector<16x32xf32>
    %cst_35 = arith.constant dense<0.000000e+00> : vector<16xf32>
    %97 = vector.multi_reduction <add>, %96, %cst_35 [1] : vector<16x32xf32> to vector<16xf32>
    %98 = vector.shape_cast %97 : vector<16xf32> to vector<16x1xf32>
    %cst_36 = arith.constant 3.200000e+01 : f32
    %99 = vector.broadcast %cst_36 : f32 to vector<16x1xf32>
    %100 = arith.divf %98, %99 : vector<16x1xf32>
    %101 = vector.broadcast %100 : vector<16x1xf32> to vector<16x32xf32>
    %102 = arith.subf %96, %101 : vector<16x32xf32>
    %103 = arith.mulf %102, %102 : vector<16x32xf32>
    %cst_37 = arith.constant dense<0.000000e+00> : vector<16xf32>
    %104 = vector.multi_reduction <add>, %103, %cst_37 [1] : vector<16x32xf32> to vector<16xf32>
    %105 = vector.shape_cast %104 : vector<16xf32> to vector<16x1xf32>
    %cst_38 = arith.constant 3.200000e+01 : f32
    %106 = vector.broadcast %cst_38 : f32 to vector<16x1xf32>
    %107 = arith.divf %105, %106 : vector<16x1xf32>
    %108 = vector.broadcast %100 : vector<16x1xf32> to vector<16x32xf32>
    %109 = arith.subf %96, %108 : vector<16x32xf32>
    %cst_39 = arith.constant 9.99999974E-6 : f32
    %110 = vector.broadcast %cst_39 : f32 to vector<16x1xf32>
    %111 = arith.addf %107, %110 : vector<16x1xf32>
    %112 = math.rsqrt %111 : vector<16x1xf32>
    %113 = vector.broadcast %112 : vector<16x1xf32> to vector<16x32xf32>
    %114 = arith.mulf %109, %113 : vector<16x32xf32>
    %115 = vector.broadcast %40 : vector<1x32xf32> to vector<16x32xf32>
    %116 = arith.mulf %115, %114 : vector<16x32xf32>
    %117 = vector.broadcast %41 : vector<1x32xf32> to vector<16x32xf32>
    %118 = arith.addf %116, %117 : vector<16x32xf32>
    %cst_40 = arith.constant dense<0.000000e+00> : vector<16x32xf32>
    %119 = tpu.matmul %118, %35, %cst_40 {dimension_numbers = #tpu.dot_dimension_numbers<[1], [0], [0], [1], [0, 0, 1, 1], [], []>} : vector<16x32xf32>, vector<32x32xf32>, vector<16x32xf32> -> vector<16x32xf32>
    %120 = vector.broadcast %38 : vector<1x32xf32> to vector<16x32xf32>
    %121 = arith.addf %119, %120 : vector<16x32xf32>
    %cst_41 = arith.constant 0.000000e+00 : f32
    %122 = vector.broadcast %cst_41 : f32 to vector<16x32xf32>
    %123 = arith.maximumf %121, %122 : vector<16x32xf32>
    %cst_42 = arith.constant dense<0.000000e+00> : vector<16x32xf32>
    %124 = tpu.matmul %123, %36, %cst_42 {dimension_numbers = #tpu.dot_dimension_numbers<[1], [0], [0], [1], [0, 0, 1, 1], [], []>} : vector<16x32xf32>, vector<32x32xf32>, vector<16x32xf32> -> vector<16x32xf32>
    %125 = vector.broadcast %39 : vector<1x32xf32> to vector<16x32xf32>
    %126 = arith.addf %124, %125 : vector<16x32xf32>
    %127 = arith.addf %118, %126 : vector<16x32xf32>
    %cst_43 = arith.constant dense<0.000000e+00> : vector<16xf32>
    %128 = vector.multi_reduction <add>, %127, %cst_43 [1] : vector<16x32xf32> to vector<16xf32>
    %129 = vector.shape_cast %128 : vector<16xf32> to vector<16x1xf32>
    %cst_44 = arith.constant 3.200000e+01 : f32
    %130 = vector.broadcast %cst_44 : f32 to vector<16x1xf32>
    %131 = arith.divf %129, %130 : vector<16x1xf32>
    %132 = vector.broadcast %131 : vector<16x1xf32> to vector<16x32xf32>
    %133 = arith.subf %127, %132 : vector<16x32xf32>
    %134 = arith.mulf %133, %133 : vector<16x32xf32>
    %cst_45 = arith.constant dense<0.000000e+00> : vector<16xf32>
    %135 = vector.multi_reduction <add>, %134, %cst_45 [1] : vector<16x32xf32> to vector<16xf32>
    %136 = vector.shape_cast %135 : vector<16xf32> to vector<16x1xf32>
    %cst_46 = arith.constant 3.200000e+01 : f32
    %137 = vector.broadcast %cst_46 : f32 to vector<16x1xf32>
    %138 = arith.divf %136, %137 : vector<16x1xf32>
    %139 = vector.broadcast %131 : vector<16x1xf32> to vector<16x32xf32>
    %140 = arith.subf %127, %139 : vector<16x32xf32>
    %cst_47 = arith.constant 9.99999974E-6 : f32
    %141 = vector.broadcast %cst_47 : f32 to vector<16x1xf32>
    %142 = arith.addf %138, %141 : vector<16x1xf32>
    %143 = math.rsqrt %142 : vector<16x1xf32>
    %144 = vector.broadcast %143 : vector<16x1xf32> to vector<16x32xf32>
    %145 = arith.mulf %140, %144 : vector<16x32xf32>
    %146 = vector.broadcast %42 : vector<1x32xf32> to vector<16x32xf32>
    %147 = arith.mulf %146, %145 : vector<16x32xf32>
    %148 = vector.broadcast %43 : vector<1x32xf32> to vector<16x32xf32>
    %149 = arith.addf %147, %148 : vector<16x32xf32>
    %c1_48 = arith.constant 1 : index
    %c0_49 = arith.constant 0 : index
    %c0_50 = arith.constant 0 : index
    %150 = vector.load %arg3[%c1_48, %c0_49, %c0_50] : memref<2x32x96xf32, #tpu.memory_space<vmem>>, vector<1x32x96xf32>
    %151 = vector.shape_cast %150 : vector<1x32x96xf32> to vector<32x96xf32>
    %c1_51 = arith.constant 1 : index
    %c0_52 = arith.constant 0 : index
    %c0_53 = arith.constant 0 : index
    %152 = vector.load %arg4[%c1_51, %c0_52, %c0_53] : memref<2x1x96xf32, #tpu.memory_space<vmem>>, vector<1x1x96xf32>
    %153 = vector.shape_cast %152 : vector<1x1x96xf32> to vector<1x96xf32>
    %c1_54 = arith.constant 1 : index
    %c0_55 = arith.constant 0 : index
    %c0_56 = arith.constant 0 : index
    %154 = vector.load %arg5[%c1_54, %c0_55, %c0_56] : memref<2x96x32xf32, #tpu.memory_space<vmem>>, vector<1x96x32xf32>
    %155 = vector.shape_cast %154 : vector<1x96x32xf32> to vector<96x32xf32>
    %c1_57 = arith.constant 1 : index
    %c0_58 = arith.constant 0 : index
    %c0_59 = arith.constant 0 : index
    %156 = vector.load %arg6[%c1_57, %c0_58, %c0_59] : memref<2x8x32xf32, #tpu.memory_space<vmem>>, vector<1x8x32xf32>
    %157 = vector.shape_cast %156 : vector<1x8x32xf32> to vector<8x32xf32>
    %158 = vector.extract_strided_slice %155 {offsets = [0, 0], sizes = [32, 32], strides = [1, 1]} : vector<96x32xf32> to vector<32x32xf32>
    %159 = vector.extract_strided_slice %155 {offsets = [32, 0], sizes = [32, 32], strides = [1, 1]} : vector<96x32xf32> to vector<32x32xf32>
    %160 = vector.extract_strided_slice %155 {offsets = [64, 0], sizes = [32, 32], strides = [1, 1]} : vector<96x32xf32> to vector<32x32xf32>
    %161 = vector.extract_strided_slice %157 {offsets = [0, 0], sizes = [1, 32], strides = [1, 1]} : vector<8x32xf32> to vector<1x32xf32>
    %162 = vector.extract_strided_slice %157 {offsets = [1, 0], sizes = [1, 32], strides = [1, 1]} : vector<8x32xf32> to vector<1x32xf32>
    %163 = vector.extract_strided_slice %157 {offsets = [2, 0], sizes = [1, 32], strides = [1, 1]} : vector<8x32xf32> to vector<1x32xf32>
    %164 = vector.extract_strided_slice %157 {offsets = [3, 0], sizes = [1, 32], strides = [1, 1]} : vector<8x32xf32> to vector<1x32xf32>
    %165 = vector.extract_strided_slice %157 {offsets = [4, 0], sizes = [1, 32], strides = [1, 1]} : vector<8x32xf32> to vector<1x32xf32>
    %166 = vector.extract_strided_slice %157 {offsets = [5, 0], sizes = [1, 32], strides = [1, 1]} : vector<8x32xf32> to vector<1x32xf32>
    %167 = vector.extract_strided_slice %157 {offsets = [6, 0], sizes = [1, 32], strides = [1, 1]} : vector<8x32xf32> to vector<1x32xf32>
    %cst_60 = arith.constant dense<0.000000e+00> : vector<16x96xf32>
    %168 = tpu.matmul %149, %151, %cst_60 {dimension_numbers = #tpu.dot_dimension_numbers<[1], [0], [0], [1], [0, 0, 1, 1], [], []>} : vector<16x32xf32>, vector<32x96xf32>, vector<16x96xf32> -> vector<16x96xf32>
    %169 = vector.broadcast %153 : vector<1x96xf32> to vector<16x96xf32>
    %170 = arith.addf %168, %169 : vector<16x96xf32>
    %171 = vector.extract_strided_slice %170 {offsets = [0, 0], sizes = [16, 32], strides = [1, 1]} : vector<16x96xf32> to vector<16x32xf32>
    %172 = vector.shape_cast %171 : vector<16x32xf32> to vector<2x8x32xf32>
    %173 = vector.extract_strided_slice %170 {offsets = [0, 32], sizes = [16, 32], strides = [1, 1]} : vector<16x96xf32> to vector<16x32xf32>
    %174 = vector.shape_cast %173 : vector<16x32xf32> to vector<2x8x32xf32>
    %175 = vector.extract_strided_slice %170 {offsets = [0, 64], sizes = [16, 32], strides = [1, 1]} : vector<16x96xf32> to vector<16x32xf32>
    %176 = vector.shape_cast %175 : vector<16x32xf32> to vector<2x8x32xf32>
    %177 = vector.extract_strided_slice %172 {offsets = [0, 0, 0], sizes = [2, 8, 16], strides = [1, 1, 1]} : vector<2x8x32xf32> to vector<2x8x16xf32>
    %178 = vector.extract_strided_slice %174 {offsets = [0, 0, 0], sizes = [2, 8, 16], strides = [1, 1, 1]} : vector<2x8x32xf32> to vector<2x8x16xf32>
    "tpu.trace_start"() <{level = 10 : i32, message = "bld,bmd->blm"}> : () -> ()
    %cst_61 = arith.constant dense<0.000000e+00> : vector<2x8x8xf32>
    %179 = tpu.matmul %177, %178, %cst_61 {dimension_numbers = #tpu.dot_dimension_numbers<[2], [2], [1], [1], [0, 0, 0, 1, 1, 1], [0], [0]>} : vector<2x8x16xf32>, vector<2x8x16xf32>, vector<2x8x8xf32> -> vector<2x8x8xf32>
    "tpu.trace_stop"() : () -> ()
    %cst_62 = arith.constant 2.500000e-01 : f32
    %180 = vector.broadcast %cst_62 : f32 to vector<2x8x8xf32>
    %181 = arith.mulf %179, %180 : vector<2x8x8xf32>
    %182 = vector.broadcast %25 : vector<2x1x8xf32> to vector<2x8x8xf32>
    %183 = arith.addf %181, %182 : vector<2x8x8xf32>
    %cst_63 = arith.constant dense<0xFF800000> : vector<2x8xf32>
    %184 = vector.multi_reduction <maximumf>, %183, %cst_63 [2] : vector<2x8x8xf32> to vector<2x8xf32>
    %185 = vector.shape_cast %184 : vector<2x8xf32> to vector<2x8x1xf32>
    %186 = vector.broadcast %185 : vector<2x8x1xf32> to vector<2x8x8xf32>
    %187 = arith.subf %183, %186 : vector<2x8x8xf32>
    %188 = math.exp %187 : vector<2x8x8xf32>
    %cst_64 = arith.constant dense<0.000000e+00> : vector<2x8xf32>
    %189 = vector.multi_reduction <add>, %188, %cst_64 [2] : vector<2x8x8xf32> to vector<2x8xf32>
    %190 = vector.shape_cast %189 : vector<2x8xf32> to vector<2x8x1xf32>
    %191 = tpu.reciprocal %190 {approx = true} : vector<2x8x1xf32> -> vector<2x8x1xf32>
    %192 = vector.broadcast %191 : vector<2x8x1xf32> to vector<2x8x8xf32>
    %193 = arith.mulf %188, %192 : vector<2x8x8xf32>
    %194 = vector.extract_strided_slice %176 {offsets = [0, 0, 0], sizes = [2, 8, 16], strides = [1, 1, 1]} : vector<2x8x32xf32> to vector<2x8x16xf32>
    "tpu.trace_start"() <{level = 10 : i32, message = "blm,bmd->bld"}> : () -> ()
    %cst_65 = arith.constant dense<0.000000e+00> : vector<2x8x16xf32>
    %195 = tpu.matmul %193, %194, %cst_65 {dimension_numbers = #tpu.dot_dimension_numbers<[2], [1], [1], [2], [0, 0, 0, 1, 1, 2], [0], [0]>} : vector<2x8x8xf32>, vector<2x8x16xf32>, vector<2x8x16xf32> -> vector<2x8x16xf32>
    "tpu.trace_stop"() : () -> ()
    %196 = vector.extract_strided_slice %172 {offsets = [0, 0, 16], sizes = [2, 8, 16], strides = [1, 1, 1]} : vector<2x8x32xf32> to vector<2x8x16xf32>
    %197 = vector.extract_strided_slice %174 {offsets = [0, 0, 16], sizes = [2, 8, 16], strides = [1, 1, 1]} : vector<2x8x32xf32> to vector<2x8x16xf32>
    "tpu.trace_start"() <{level = 10 : i32, message = "bld,bmd->blm"}> : () -> ()
    %cst_66 = arith.constant dense<0.000000e+00> : vector<2x8x8xf32>
    %198 = tpu.matmul %196, %197, %cst_66 {dimension_numbers = #tpu.dot_dimension_numbers<[2], [2], [1], [1], [0, 0, 0, 1, 1, 1], [0], [0]>} : vector<2x8x16xf32>, vector<2x8x16xf32>, vector<2x8x8xf32> -> vector<2x8x8xf32>
    "tpu.trace_stop"() : () -> ()
    %cst_67 = arith.constant 2.500000e-01 : f32
    %199 = vector.broadcast %cst_67 : f32 to vector<2x8x8xf32>
    %200 = arith.mulf %198, %199 : vector<2x8x8xf32>
    %201 = vector.broadcast %25 : vector<2x1x8xf32> to vector<2x8x8xf32>
    %202 = arith.addf %200, %201 : vector<2x8x8xf32>
    %cst_68 = arith.constant dense<0xFF800000> : vector<2x8xf32>
    %203 = vector.multi_reduction <maximumf>, %202, %cst_68 [2] : vector<2x8x8xf32> to vector<2x8xf32>
    %204 = vector.shape_cast %203 : vector<2x8xf32> to vector<2x8x1xf32>
    %205 = vector.broadcast %204 : vector<2x8x1xf32> to vector<2x8x8xf32>
    %206 = arith.subf %202, %205 : vector<2x8x8xf32>
    %207 = math.exp %206 : vector<2x8x8xf32>
    %cst_69 = arith.constant dense<0.000000e+00> : vector<2x8xf32>
    %208 = vector.multi_reduction <add>, %207, %cst_69 [2] : vector<2x8x8xf32> to vector<2x8xf32>
    %209 = vector.shape_cast %208 : vector<2x8xf32> to vector<2x8x1xf32>
    %210 = tpu.reciprocal %209 {approx = true} : vector<2x8x1xf32> -> vector<2x8x1xf32>
    %211 = vector.broadcast %210 : vector<2x8x1xf32> to vector<2x8x8xf32>
    %212 = arith.mulf %207, %211 : vector<2x8x8xf32>
    %213 = vector.extract_strided_slice %176 {offsets = [0, 0, 16], sizes = [2, 8, 16], strides = [1, 1, 1]} : vector<2x8x32xf32> to vector<2x8x16xf32>
    "tpu.trace_start"() <{level = 10 : i32, message = "blm,bmd->bld"}> : () -> ()
    %cst_70 = arith.constant dense<0.000000e+00> : vector<2x8x16xf32>
    %214 = tpu.matmul %212, %213, %cst_70 {dimension_numbers = #tpu.dot_dimension_numbers<[2], [1], [1], [2], [0, 0, 0, 1, 1, 2], [0], [0]>} : vector<2x8x8xf32>, vector<2x8x16xf32>, vector<2x8x16xf32> -> vector<2x8x16xf32>
    "tpu.trace_stop"() : () -> ()
    %215 = tpu.concatenate %195, %214 in 2 : vector<2x8x16xf32>, vector<2x8x16xf32> -> vector<2x8x32xf32>
    %216 = vector.shape_cast %215 : vector<2x8x32xf32> to vector<16x32xf32>
    %cst_71 = arith.constant dense<0.000000e+00> : vector<16x32xf32>
    %217 = tpu.matmul %216, %158, %cst_71 {dimension_numbers = #tpu.dot_dimension_numbers<[1], [0], [0], [1], [0, 0, 1, 1], [], []>} : vector<16x32xf32>, vector<32x32xf32>, vector<16x32xf32> -> vector<16x32xf32>
    %218 = vector.broadcast %161 : vector<1x32xf32> to vector<16x32xf32>
    %219 = arith.addf %217, %218 : vector<16x32xf32>
    %220 = arith.addf %149, %219 : vector<16x32xf32>
    %cst_72 = arith.constant dense<0.000000e+00> : vector<16xf32>
    %221 = vector.multi_reduction <add>, %220, %cst_72 [1] : vector<16x32xf32> to vector<16xf32>
    %222 = vector.shape_cast %221 : vector<16xf32> to vector<16x1xf32>
    %cst_73 = arith.constant 3.200000e+01 : f32
    %223 = vector.broadcast %cst_73 : f32 to vector<16x1xf32>
    %224 = arith.divf %222, %223 : vector<16x1xf32>
    %225 = vector.broadcast %224 : vector<16x1xf32> to vector<16x32xf32>
    %226 = arith.subf %220, %225 : vector<16x32xf32>
    %227 = arith.mulf %226, %226 : vector<16x32xf32>
    %cst_74 = arith.constant dense<0.000000e+00> : vector<16xf32>
    %228 = vector.multi_reduction <add>, %227, %cst_74 [1] : vector<16x32xf32> to vector<16xf32>
    %229 = vector.shape_cast %228 : vector<16xf32> to vector<16x1xf32>
    %cst_75 = arith.constant 3.200000e+01 : f32
    %230 = vector.broadcast %cst_75 : f32 to vector<16x1xf32>
    %231 = arith.divf %229, %230 : vector<16x1xf32>
    %232 = vector.broadcast %224 : vector<16x1xf32> to vector<16x32xf32>
    %233 = arith.subf %220, %232 : vector<16x32xf32>
    %cst_76 = arith.constant 9.99999974E-6 : f32
    %234 = vector.broadcast %cst_76 : f32 to vector<16x1xf32>
    %235 = arith.addf %231, %234 : vector<16x1xf32>
    %236 = math.rsqrt %235 : vector<16x1xf32>
    %237 = vector.broadcast %236 : vector<16x1xf32> to vector<16x32xf32>
    %238 = arith.mulf %233, %237 : vector<16x32xf32>
    %239 = vector.broadcast %164 : vector<1x32xf32> to vector<16x32xf32>
    %240 = arith.mulf %239, %238 : vector<16x32xf32>
    %241 = vector.broadcast %165 : vector<1x32xf32> to vector<16x32xf32>
    %242 = arith.addf %240, %241 : vector<16x32xf32>
    %cst_77 = arith.constant dense<0.000000e+00> : vector<16x32xf32>
    %243 = tpu.matmul %242, %159, %cst_77 {dimension_numbers = #tpu.dot_dimension_numbers<[1], [0], [0], [1], [0, 0, 1, 1], [], []>} : vector<16x32xf32>, vector<32x32xf32>, vector<16x32xf32> -> vector<16x32xf32>
    %244 = vector.broadcast %162 : vector<1x32xf32> to vector<16x32xf32>
    %245 = arith.addf %243, %244 : vector<16x32xf32>
    %cst_78 = arith.constant 0.000000e+00 : f32
    %246 = vector.broadcast %cst_78 : f32 to vector<16x32xf32>
    %247 = arith.maximumf %245, %246 : vector<16x32xf32>
    %cst_79 = arith.constant dense<0.000000e+00> : vector<16x32xf32>
    %248 = tpu.matmul %247, %160, %cst_79 {dimension_numbers = #tpu.dot_dimension_numbers<[1], [0], [0], [1], [0, 0, 1, 1], [], []>} : vector<16x32xf32>, vector<32x32xf32>, vector<16x32xf32> -> vector<16x32xf32>
    %249 = vector.broadcast %163 : vector<1x32xf32> to vector<16x32xf32>
    %250 = arith.addf %248, %249 : vector<16x32xf32>
    %251 = arith.addf %242, %250 : vector<16x32xf32>
    %cst_80 = arith.constant dense<0.000000e+00> : vector<16xf32>
    %252 = vector.multi_reduction <add>, %251, %cst_80 [1] : vector<16x32xf32> to vector<16xf32>
    %253 = vector.shape_cast %252 : vector<16xf32> to vector<16x1xf32>
    %cst_81 = arith.constant 3.200000e+01 : f32
    %254 = vector.broadcast %cst_81 : f32 to vector<16x1xf32>
    %255 = arith.divf %253, %254 : vector<16x1xf32>
    %256 = vector.broadcast %255 : vector<16x1xf32> to vector<16x32xf32>
    %257 = arith.subf %251, %256 : vector<16x32xf32>
    %258 = arith.mulf %257, %257 : vector<16x32xf32>
    %cst_82 = arith.constant dense<0.000000e+00> : vector<16xf32>
    %259 = vector.multi_reduction <add>, %258, %cst_82 [1] : vector<16x32xf32> to vector<16xf32>
    %260 = vector.shape_cast %259 : vector<16xf32> to vector<16x1xf32>
    %cst_83 = arith.constant 3.200000e+01 : f32
    %261 = vector.broadcast %cst_83 : f32 to vector<16x1xf32>
    %262 = arith.divf %260, %261 : vector<16x1xf32>
    %263 = vector.broadcast %255 : vector<16x1xf32> to vector<16x32xf32>
    %264 = arith.subf %251, %263 : vector<16x32xf32>
    %cst_84 = arith.constant 9.99999974E-6 : f32
    %265 = vector.broadcast %cst_84 : f32 to vector<16x1xf32>
    %266 = arith.addf %262, %265 : vector<16x1xf32>
    %267 = math.rsqrt %266 : vector<16x1xf32>
    %268 = vector.broadcast %267 : vector<16x1xf32> to vector<16x32xf32>
    %269 = arith.mulf %264, %268 : vector<16x32xf32>
    %270 = vector.broadcast %166 : vector<1x32xf32> to vector<16x32xf32>
    %271 = arith.mulf %270, %269 : vector<16x32xf32>
    %272 = vector.broadcast %167 : vector<1x32xf32> to vector<16x32xf32>
    %273 = arith.addf %271, %272 : vector<16x32xf32>
    %c2 = arith.constant 2 : index
    %c0_85 = arith.constant 0 : index
    %274 = vector.load %arg2[%c2, %c0_85] : memref<4x32xf32, #tpu.memory_space<vmem>>, vector<1x32xf32>
    %c3 = arith.constant 3 : index
    %c0_86 = arith.constant 0 : index
    %275 = vector.load %arg2[%c3, %c0_86] : memref<4x32xf32, #tpu.memory_space<vmem>>, vector<1x32xf32>
    %cst_87 = arith.constant dense<0.000000e+00> : vector<16xf32>
    %276 = vector.multi_reduction <add>, %273, %cst_87 [1] : vector<16x32xf32> to vector<16xf32>
    %277 = vector.shape_cast %276 : vector<16xf32> to vector<16x1xf32>
    %cst_88 = arith.constant 3.200000e+01 : f32
    %278 = vector.broadcast %cst_88 : f32 to vector<16x1xf32>
    %279 = arith.divf %277, %278 : vector<16x1xf32>
    %280 = vector.broadcast %279 : vector<16x1xf32> to vector<16x32xf32>
    %281 = arith.subf %273, %280 : vector<16x32xf32>
    %282 = arith.mulf %281, %281 : vector<16x32xf32>
    %cst_89 = arith.constant dense<0.000000e+00> : vector<16xf32>
    %283 = vector.multi_reduction <add>, %282, %cst_89 [1] : vector<16x32xf32> to vector<16xf32>
    %284 = vector.shape_cast %283 : vector<16xf32> to vector<16x1xf32>
    %cst_90 = arith.constant 3.200000e+01 : f32
    %285 = vector.broadcast %cst_90 : f32 to vector<16x1xf32>
    %286 = arith.divf %284, %285 : vector<16x1xf32>
    %287 = vector.broadcast %279 : vector<16x1xf32> to vector<16x32xf32>
    %288 = arith.subf %273, %287 : vector<16x32xf32>
    %cst_91 = arith.constant 9.99999974E-6 : f32
    %289 = vector.broadcast %cst_91 : f32 to vector<16x1xf32>
    %290 = arith.addf %286, %289 : vector<16x1xf32>
    %291 = math.rsqrt %290 : vector<16x1xf32>
    %292 = vector.broadcast %291 : vector<16x1xf32> to vector<16x32xf32>
    %293 = arith.mulf %288, %292 : vector<16x32xf32>
    %294 = vector.broadcast %274 : vector<1x32xf32> to vector<16x32xf32>
    %295 = arith.mulf %294, %293 : vector<16x32xf32>
    %296 = vector.broadcast %275 : vector<1x32xf32> to vector<16x32xf32>
    %297 = arith.addf %295, %296 : vector<16x32xf32>
    %298 = vector.extract_strided_slice %297 {offsets = [7, 0], sizes = [1, 32], strides = [1, 1]} : vector<16x32xf32> to vector<1x32xf32>
    %299 = vector.extract_strided_slice %297 {offsets = [15, 0], sizes = [1, 32], strides = [1, 1]} : vector<16x32xf32> to vector<1x32xf32>
    %300 = tpu.concatenate %298, %299 in 0 : vector<1x32xf32>, vector<1x32xf32> -> vector<2x32xf32>
    %c0_92 = arith.constant 0 : index
    %c0_93 = arith.constant 0 : index
    %301 = vector.load %arg7[%c0_92, %c0_93] : memref<16x32xf32, #tpu.memory_space<vmem>>, vector<16x32xf32>
    %c0_94 = arith.constant 0 : index
    %c0_95 = arith.constant 0 : index
    %c0_96 = arith.constant 0 : index
    %302 = vector.load %arg8[%c0_94, %c0_95, %c0_96] : memref<2x32x96xf32, #tpu.memory_space<vmem>>, vector<1x32x96xf32>
    %303 = vector.shape_cast %302 : vector<1x32x96xf32> to vector<32x96xf32>
    %c1_97 = arith.constant 1 : index
    %c0_98 = arith.constant 0 : index
    %c0_99 = arith.constant 0 : index
    %304 = vector.load %arg8[%c1_97, %c0_98, %c0_99] : memref<2x32x96xf32, #tpu.memory_space<vmem>>, vector<1x32x96xf32>
    %305 = vector.shape_cast %304 : vector<1x32x96xf32> to vector<32x96xf32>
    %c0_100 = arith.constant 0 : index
    %c0_101 = arith.constant 0 : index
    %306 = vector.load %arg9[%c0_100, %c0_101] : memref<2x1xi32, #tpu.memory_space<vmem>>, vector<2x1xi32>
    %cst_102 = arith.constant dense<0.000000e+00> : vector<16x96xf32>
    %307 = tpu.matmul %301, %303, %cst_102 {dimension_numbers = #tpu.dot_dimension_numbers<[1], [0], [0], [1], [0, 0, 1, 1], [], []>} : vector<16x32xf32>, vector<32x96xf32>, vector<16x96xf32> -> vector<16x96xf32>
    %cst_103 = arith.constant 0.000000e+00 : f32
    %308 = vector.broadcast %cst_103 : f32 to vector<2x32xf32>
    %309 = vector.extract_strided_slice %307 {offsets = [0, 0], sizes = [2, 96], strides = [1, 1]} : vector<16x96xf32> to vector<2x96xf32>
    %cst_104 = arith.constant dense<0.000000e+00> : vector<2x96xf32>
    %310 = tpu.matmul %308, %305, %cst_104 {dimension_numbers = #tpu.dot_dimension_numbers<[1], [0], [0], [1], [0, 0, 1, 1], [], []>} : vector<2x32xf32>, vector<32x96xf32>, vector<2x96xf32> -> vector<2x96xf32>
    %311 = vector.extract_strided_slice %309 {offsets = [0, 0], sizes = [2, 32], strides = [1, 1]} : vector<2x96xf32> to vector<2x32xf32>
    %312 = vector.extract_strided_slice %310 {offsets = [0, 0], sizes = [2, 32], strides = [1, 1]} : vector<2x96xf32> to vector<2x32xf32>
    %313 = arith.addf %311, %312 : vector<2x32xf32>
    %314 = arith.negf %313 : vector<2x32xf32>
    %315 = math.exp %314 : vector<2x32xf32>
    %cst_105 = arith.constant 1.000000e+00 : f32
    %316 = vector.broadcast %cst_105 : f32 to vector<2x32xf32>
    %317 = arith.addf %316, %315 : vector<2x32xf32>
    %318 = arith.divf %316, %317 : vector<2x32xf32>
    %319 = vector.extract_strided_slice %309 {offsets = [0, 32], sizes = [2, 32], strides = [1, 1]} : vector<2x96xf32> to vector<2x32xf32>
    %320 = vector.extract_strided_slice %310 {offsets = [0, 32], sizes = [2, 32], strides = [1, 1]} : vector<2x96xf32> to vector<2x32xf32>
    %321 = arith.addf %319, %320 : vector<2x32xf32>
    %322 = arith.negf %321 : vector<2x32xf32>
    %323 = math.exp %322 : vector<2x32xf32>
    %cst_106 = arith.constant 1.000000e+00 : f32
    %324 = vector.broadcast %cst_106 : f32 to vector<2x32xf32>
    %325 = arith.addf %324, %323 : vector<2x32xf32>
    %326 = arith.divf %324, %325 : vector<2x32xf32>
    %327 = vector.extract_strided_slice %309 {offsets = [0, 64], sizes = [2, 32], strides = [1, 1]} : vector<2x96xf32> to vector<2x32xf32>
    %328 = vector.extract_strided_slice %310 {offsets = [0, 64], sizes = [2, 32], strides = [1, 1]} : vector<2x96xf32> to vector<2x32xf32>
    %329 = arith.mulf %318, %328 : vector<2x32xf32>
    %330 = arith.addf %327, %329 : vector<2x32xf32>
    %331 = math.tanh %330 : vector<2x32xf32>
    %cst_107 = arith.constant 1.000000e+00 : f32
    %332 = vector.broadcast %cst_107 : f32 to vector<2x32xf32>
    %333 = arith.subf %332, %326 : vector<2x32xf32>
    %334 = arith.mulf %333, %331 : vector<2x32xf32>
    %335 = arith.mulf %326, %308 : vector<2x32xf32>
    %336 = arith.addf %334, %335 : vector<2x32xf32>
    %c0_i32 = arith.constant 0 : i32
    %337 = vector.broadcast %c0_i32 : i32 to vector<2x1xi32>
    %338 = arith.cmpi sgt, %306, %337 : vector<2x1xi32>
    %339 = vector.shape_cast %338 : vector<2x1xi1> to vector<2x1xi1>
    %340 = vector.broadcast %339 : vector<2x1xi1> to vector<2x32xi1>
    %341 = arith.select %340, %336, %308 : vector<2x32xi1>, vector<2x32xf32>
    %342 = vector.extract_strided_slice %307 {offsets = [2, 0], sizes = [2, 96], strides = [1, 1]} : vector<16x96xf32> to vector<2x96xf32>
    %cst_108 = arith.constant dense<0.000000e+00> : vector<2x96xf32>
    %343 = tpu.matmul %341, %305, %cst_108 {dimension_numbers = #tpu.dot_dimension_numbers<[1], [0], [0], [1], [0, 0, 1, 1], [], []>} : vector<2x32xf32>, vector<32x96xf32>, vector<2x96xf32> -> vector<2x96xf32>
    %344 = vector.extract_strided_slice %342 {offsets = [0, 0], sizes = [2, 32], strides = [1, 1]} : vector<2x96xf32> to vector<2x32xf32>
    %345 = vector.extract_strided_slice %343 {offsets = [0, 0], sizes = [2, 32], strides = [1, 1]} : vector<2x96xf32> to vector<2x32xf32>
    %346 = arith.addf %344, %345 : vector<2x32xf32>
    %347 = arith.negf %346 : vector<2x32xf32>
    %348 = math.exp %347 : vector<2x32xf32>
    %cst_109 = arith.constant 1.000000e+00 : f32
    %349 = vector.broadcast %cst_109 : f32 to vector<2x32xf32>
    %350 = arith.addf %349, %348 : vector<2x32xf32>
    %351 = arith.divf %349, %350 : vector<2x32xf32>
    %352 = vector.extract_strided_slice %342 {offsets = [0, 32], sizes = [2, 32], strides = [1, 1]} : vector<2x96xf32> to vector<2x32xf32>
    %353 = vector.extract_strided_slice %343 {offsets = [0, 32], sizes = [2, 32], strides = [1, 1]} : vector<2x96xf32> to vector<2x32xf32>
    %354 = arith.addf %352, %353 : vector<2x32xf32>
    %355 = arith.negf %354 : vector<2x32xf32>
    %356 = math.exp %355 : vector<2x32xf32>
    %cst_110 = arith.constant 1.000000e+00 : f32
    %357 = vector.broadcast %cst_110 : f32 to vector<2x32xf32>
    %358 = arith.addf %357, %356 : vector<2x32xf32>
    %359 = arith.divf %357, %358 : vector<2x32xf32>
    %360 = vector.extract_strided_slice %342 {offsets = [0, 64], sizes = [2, 32], strides = [1, 1]} : vector<2x96xf32> to vector<2x32xf32>
    %361 = vector.extract_strided_slice %343 {offsets = [0, 64], sizes = [2, 32], strides = [1, 1]} : vector<2x96xf32> to vector<2x32xf32>
    %362 = arith.mulf %351, %361 : vector<2x32xf32>
    %363 = arith.addf %360, %362 : vector<2x32xf32>
    %364 = math.tanh %363 : vector<2x32xf32>
    %cst_111 = arith.constant 1.000000e+00 : f32
    %365 = vector.broadcast %cst_111 : f32 to vector<2x32xf32>
    %366 = arith.subf %365, %359 : vector<2x32xf32>
    %367 = arith.mulf %366, %364 : vector<2x32xf32>
    %368 = arith.mulf %359, %341 : vector<2x32xf32>
    %369 = arith.addf %367, %368 : vector<2x32xf32>
    %c1_i32 = arith.constant 1 : i32
    %370 = vector.broadcast %c1_i32 : i32 to vector<2x1xi32>
    %371 = arith.cmpi sgt, %306, %370 : vector<2x1xi32>
    %372 = vector.shape_cast %371 : vector<2x1xi1> to vector<2x1xi1>
    %373 = vector.broadcast %372 : vector<2x1xi1> to vector<2x32xi1>
    %374 = arith.select %373, %369, %341 : vector<2x32xi1>, vector<2x32xf32>
    %375 = vector.extract_strided_slice %307 {offsets = [4, 0], sizes = [2, 96], strides = [1, 1]} : vector<16x96xf32> to vector<2x96xf32>
    %cst_112 = arith.constant dense<0.000000e+00> : vector<2x96xf32>
    %376 = tpu.matmul %374, %305, %cst_112 {dimension_numbers = #tpu.dot_dimension_numbers<[1], [0], [0], [1], [0, 0, 1, 1], [], []>} : vector<2x32xf32>, vector<32x96xf32>, vector<2x96xf32> -> vector<2x96xf32>
    %377 = vector.extract_strided_slice %375 {offsets = [0, 0], sizes = [2, 32], strides = [1, 1]} : vector<2x96xf32> to vector<2x32xf32>
    %378 = vector.extract_strided_slice %376 {offsets = [0, 0], sizes = [2, 32], strides = [1, 1]} : vector<2x96xf32> to vector<2x32xf32>
    %379 = arith.addf %377, %378 : vector<2x32xf32>
    %380 = arith.negf %379 : vector<2x32xf32>
    %381 = math.exp %380 : vector<2x32xf32>
    %cst_113 = arith.constant 1.000000e+00 : f32
    %382 = vector.broadcast %cst_113 : f32 to vector<2x32xf32>
    %383 = arith.addf %382, %381 : vector<2x32xf32>
    %384 = arith.divf %382, %383 : vector<2x32xf32>
    %385 = vector.extract_strided_slice %375 {offsets = [0, 32], sizes = [2, 32], strides = [1, 1]} : vector<2x96xf32> to vector<2x32xf32>
    %386 = vector.extract_strided_slice %376 {offsets = [0, 32], sizes = [2, 32], strides = [1, 1]} : vector<2x96xf32> to vector<2x32xf32>
    %387 = arith.addf %385, %386 : vector<2x32xf32>
    %388 = arith.negf %387 : vector<2x32xf32>
    %389 = math.exp %388 : vector<2x32xf32>
    %cst_114 = arith.constant 1.000000e+00 : f32
    %390 = vector.broadcast %cst_114 : f32 to vector<2x32xf32>
    %391 = arith.addf %390, %389 : vector<2x32xf32>
    %392 = arith.divf %390, %391 : vector<2x32xf32>
    %393 = vector.extract_strided_slice %375 {offsets = [0, 64], sizes = [2, 32], strides = [1, 1]} : vector<2x96xf32> to vector<2x32xf32>
    %394 = vector.extract_strided_slice %376 {offsets = [0, 64], sizes = [2, 32], strides = [1, 1]} : vector<2x96xf32> to vector<2x32xf32>
    %395 = arith.mulf %384, %394 : vector<2x32xf32>
    %396 = arith.addf %393, %395 : vector<2x32xf32>
    %397 = math.tanh %396 : vector<2x32xf32>
    %cst_115 = arith.constant 1.000000e+00 : f32
    %398 = vector.broadcast %cst_115 : f32 to vector<2x32xf32>
    %399 = arith.subf %398, %392 : vector<2x32xf32>
    %400 = arith.mulf %399, %397 : vector<2x32xf32>
    %401 = arith.mulf %392, %374 : vector<2x32xf32>
    %402 = arith.addf %400, %401 : vector<2x32xf32>
    %c2_i32 = arith.constant 2 : i32
    %403 = vector.broadcast %c2_i32 : i32 to vector<2x1xi32>
    %404 = arith.cmpi sgt, %306, %403 : vector<2x1xi32>
    %405 = vector.shape_cast %404 : vector<2x1xi1> to vector<2x1xi1>
    %406 = vector.broadcast %405 : vector<2x1xi1> to vector<2x32xi1>
    %407 = arith.select %406, %402, %374 : vector<2x32xi1>, vector<2x32xf32>
    %408 = vector.extract_strided_slice %307 {offsets = [6, 0], sizes = [2, 96], strides = [1, 1]} : vector<16x96xf32> to vector<2x96xf32>
    %cst_116 = arith.constant dense<0.000000e+00> : vector<2x96xf32>
    %409 = tpu.matmul %407, %305, %cst_116 {dimension_numbers = #tpu.dot_dimension_numbers<[1], [0], [0], [1], [0, 0, 1, 1], [], []>} : vector<2x32xf32>, vector<32x96xf32>, vector<2x96xf32> -> vector<2x96xf32>
    %410 = vector.extract_strided_slice %408 {offsets = [0, 0], sizes = [2, 32], strides = [1, 1]} : vector<2x96xf32> to vector<2x32xf32>
    %411 = vector.extract_strided_slice %409 {offsets = [0, 0], sizes = [2, 32], strides = [1, 1]} : vector<2x96xf32> to vector<2x32xf32>
    %412 = arith.addf %410, %411 : vector<2x32xf32>
    %413 = arith.negf %412 : vector<2x32xf32>
    %414 = math.exp %413 : vector<2x32xf32>
    %cst_117 = arith.constant 1.000000e+00 : f32
    %415 = vector.broadcast %cst_117 : f32 to vector<2x32xf32>
    %416 = arith.addf %415, %414 : vector<2x32xf32>
    %417 = arith.divf %415, %416 : vector<2x32xf32>
    %418 = vector.extract_strided_slice %408 {offsets = [0, 32], sizes = [2, 32], strides = [1, 1]} : vector<2x96xf32> to vector<2x32xf32>
    %419 = vector.extract_strided_slice %409 {offsets = [0, 32], sizes = [2, 32], strides = [1, 1]} : vector<2x96xf32> to vector<2x32xf32>
    %420 = arith.addf %418, %419 : vector<2x32xf32>
    %421 = arith.negf %420 : vector<2x32xf32>
    %422 = math.exp %421 : vector<2x32xf32>
    %cst_118 = arith.constant 1.000000e+00 : f32
    %423 = vector.broadcast %cst_118 : f32 to vector<2x32xf32>
    %424 = arith.addf %423, %422 : vector<2x32xf32>
    %425 = arith.divf %423, %424 : vector<2x32xf32>
    %426 = vector.extract_strided_slice %408 {offsets = [0, 64], sizes = [2, 32], strides = [1, 1]} : vector<2x96xf32> to vector<2x32xf32>
    %427 = vector.extract_strided_slice %409 {offsets = [0, 64], sizes = [2, 32], strides = [1, 1]} : vector<2x96xf32> to vector<2x32xf32>
    %428 = arith.mulf %417, %427 : vector<2x32xf32>
    %429 = arith.addf %426, %428 : vector<2x32xf32>
    %430 = math.tanh %429 : vector<2x32xf32>
    %cst_119 = arith.constant 1.000000e+00 : f32
    %431 = vector.broadcast %cst_119 : f32 to vector<2x32xf32>
    %432 = arith.subf %431, %425 : vector<2x32xf32>
    %433 = arith.mulf %432, %430 : vector<2x32xf32>
    %434 = arith.mulf %425, %407 : vector<2x32xf32>
    %435 = arith.addf %433, %434 : vector<2x32xf32>
    %c3_i32 = arith.constant 3 : i32
    %436 = vector.broadcast %c3_i32 : i32 to vector<2x1xi32>
    %437 = arith.cmpi sgt, %306, %436 : vector<2x1xi32>
    %438 = vector.shape_cast %437 : vector<2x1xi1> to vector<2x1xi1>
    %439 = vector.broadcast %438 : vector<2x1xi1> to vector<2x32xi1>
    %440 = arith.select %439, %435, %407 : vector<2x32xi1>, vector<2x32xf32>
    %441 = vector.extract_strided_slice %307 {offsets = [8, 0], sizes = [2, 96], strides = [1, 1]} : vector<16x96xf32> to vector<2x96xf32>
    %cst_120 = arith.constant dense<0.000000e+00> : vector<2x96xf32>
    %442 = tpu.matmul %440, %305, %cst_120 {dimension_numbers = #tpu.dot_dimension_numbers<[1], [0], [0], [1], [0, 0, 1, 1], [], []>} : vector<2x32xf32>, vector<32x96xf32>, vector<2x96xf32> -> vector<2x96xf32>
    %443 = vector.extract_strided_slice %441 {offsets = [0, 0], sizes = [2, 32], strides = [1, 1]} : vector<2x96xf32> to vector<2x32xf32>
    %444 = vector.extract_strided_slice %442 {offsets = [0, 0], sizes = [2, 32], strides = [1, 1]} : vector<2x96xf32> to vector<2x32xf32>
    %445 = arith.addf %443, %444 : vector<2x32xf32>
    %446 = arith.negf %445 : vector<2x32xf32>
    %447 = math.exp %446 : vector<2x32xf32>
    %cst_121 = arith.constant 1.000000e+00 : f32
    %448 = vector.broadcast %cst_121 : f32 to vector<2x32xf32>
    %449 = arith.addf %448, %447 : vector<2x32xf32>
    %450 = arith.divf %448, %449 : vector<2x32xf32>
    %451 = vector.extract_strided_slice %441 {offsets = [0, 32], sizes = [2, 32], strides = [1, 1]} : vector<2x96xf32> to vector<2x32xf32>
    %452 = vector.extract_strided_slice %442 {offsets = [0, 32], sizes = [2, 32], strides = [1, 1]} : vector<2x96xf32> to vector<2x32xf32>
    %453 = arith.addf %451, %452 : vector<2x32xf32>
    %454 = arith.negf %453 : vector<2x32xf32>
    %455 = math.exp %454 : vector<2x32xf32>
    %cst_122 = arith.constant 1.000000e+00 : f32
    %456 = vector.broadcast %cst_122 : f32 to vector<2x32xf32>
    %457 = arith.addf %456, %455 : vector<2x32xf32>
    %458 = arith.divf %456, %457 : vector<2x32xf32>
    %459 = vector.extract_strided_slice %441 {offsets = [0, 64], sizes = [2, 32], strides = [1, 1]} : vector<2x96xf32> to vector<2x32xf32>
    %460 = vector.extract_strided_slice %442 {offsets = [0, 64], sizes = [2, 32], strides = [1, 1]} : vector<2x96xf32> to vector<2x32xf32>
    %461 = arith.mulf %450, %460 : vector<2x32xf32>
    %462 = arith.addf %459, %461 : vector<2x32xf32>
    %463 = math.tanh %462 : vector<2x32xf32>
    %cst_123 = arith.constant 1.000000e+00 : f32
    %464 = vector.broadcast %cst_123 : f32 to vector<2x32xf32>
    %465 = arith.subf %464, %458 : vector<2x32xf32>
    %466 = arith.mulf %465, %463 : vector<2x32xf32>
    %467 = arith.mulf %458, %440 : vector<2x32xf32>
    %468 = arith.addf %466, %467 : vector<2x32xf32>
    %c4_i32 = arith.constant 4 : i32
    %469 = vector.broadcast %c4_i32 : i32 to vector<2x1xi32>
    %470 = arith.cmpi sgt, %306, %469 : vector<2x1xi32>
    %471 = vector.shape_cast %470 : vector<2x1xi1> to vector<2x1xi1>
    %472 = vector.broadcast %471 : vector<2x1xi1> to vector<2x32xi1>
    %473 = arith.select %472, %468, %440 : vector<2x32xi1>, vector<2x32xf32>
    %474 = vector.extract_strided_slice %307 {offsets = [10, 0], sizes = [2, 96], strides = [1, 1]} : vector<16x96xf32> to vector<2x96xf32>
    %cst_124 = arith.constant dense<0.000000e+00> : vector<2x96xf32>
    %475 = tpu.matmul %473, %305, %cst_124 {dimension_numbers = #tpu.dot_dimension_numbers<[1], [0], [0], [1], [0, 0, 1, 1], [], []>} : vector<2x32xf32>, vector<32x96xf32>, vector<2x96xf32> -> vector<2x96xf32>
    %476 = vector.extract_strided_slice %474 {offsets = [0, 0], sizes = [2, 32], strides = [1, 1]} : vector<2x96xf32> to vector<2x32xf32>
    %477 = vector.extract_strided_slice %475 {offsets = [0, 0], sizes = [2, 32], strides = [1, 1]} : vector<2x96xf32> to vector<2x32xf32>
    %478 = arith.addf %476, %477 : vector<2x32xf32>
    %479 = arith.negf %478 : vector<2x32xf32>
    %480 = math.exp %479 : vector<2x32xf32>
    %cst_125 = arith.constant 1.000000e+00 : f32
    %481 = vector.broadcast %cst_125 : f32 to vector<2x32xf32>
    %482 = arith.addf %481, %480 : vector<2x32xf32>
    %483 = arith.divf %481, %482 : vector<2x32xf32>
    %484 = vector.extract_strided_slice %474 {offsets = [0, 32], sizes = [2, 32], strides = [1, 1]} : vector<2x96xf32> to vector<2x32xf32>
    %485 = vector.extract_strided_slice %475 {offsets = [0, 32], sizes = [2, 32], strides = [1, 1]} : vector<2x96xf32> to vector<2x32xf32>
    %486 = arith.addf %484, %485 : vector<2x32xf32>
    %487 = arith.negf %486 : vector<2x32xf32>
    %488 = math.exp %487 : vector<2x32xf32>
    %cst_126 = arith.constant 1.000000e+00 : f32
    %489 = vector.broadcast %cst_126 : f32 to vector<2x32xf32>
    %490 = arith.addf %489, %488 : vector<2x32xf32>
    %491 = arith.divf %489, %490 : vector<2x32xf32>
    %492 = vector.extract_strided_slice %474 {offsets = [0, 64], sizes = [2, 32], strides = [1, 1]} : vector<2x96xf32> to vector<2x32xf32>
    %493 = vector.extract_strided_slice %475 {offsets = [0, 64], sizes = [2, 32], strides = [1, 1]} : vector<2x96xf32> to vector<2x32xf32>
    %494 = arith.mulf %483, %493 : vector<2x32xf32>
    %495 = arith.addf %492, %494 : vector<2x32xf32>
    %496 = math.tanh %495 : vector<2x32xf32>
    %cst_127 = arith.constant 1.000000e+00 : f32
    %497 = vector.broadcast %cst_127 : f32 to vector<2x32xf32>
    %498 = arith.subf %497, %491 : vector<2x32xf32>
    %499 = arith.mulf %498, %496 : vector<2x32xf32>
    %500 = arith.mulf %491, %473 : vector<2x32xf32>
    %501 = arith.addf %499, %500 : vector<2x32xf32>
    %c5_i32 = arith.constant 5 : i32
    %502 = vector.broadcast %c5_i32 : i32 to vector<2x1xi32>
    %503 = arith.cmpi sgt, %306, %502 : vector<2x1xi32>
    %504 = vector.shape_cast %503 : vector<2x1xi1> to vector<2x1xi1>
    %505 = vector.broadcast %504 : vector<2x1xi1> to vector<2x32xi1>
    %506 = arith.select %505, %501, %473 : vector<2x32xi1>, vector<2x32xf32>
    %507 = vector.extract_strided_slice %307 {offsets = [12, 0], sizes = [2, 96], strides = [1, 1]} : vector<16x96xf32> to vector<2x96xf32>
    %cst_128 = arith.constant dense<0.000000e+00> : vector<2x96xf32>
    %508 = tpu.matmul %506, %305, %cst_128 {dimension_numbers = #tpu.dot_dimension_numbers<[1], [0], [0], [1], [0, 0, 1, 1], [], []>} : vector<2x32xf32>, vector<32x96xf32>, vector<2x96xf32> -> vector<2x96xf32>
    %509 = vector.extract_strided_slice %507 {offsets = [0, 0], sizes = [2, 32], strides = [1, 1]} : vector<2x96xf32> to vector<2x32xf32>
    %510 = vector.extract_strided_slice %508 {offsets = [0, 0], sizes = [2, 32], strides = [1, 1]} : vector<2x96xf32> to vector<2x32xf32>
    %511 = arith.addf %509, %510 : vector<2x32xf32>
    %512 = arith.negf %511 : vector<2x32xf32>
    %513 = math.exp %512 : vector<2x32xf32>
    %cst_129 = arith.constant 1.000000e+00 : f32
    %514 = vector.broadcast %cst_129 : f32 to vector<2x32xf32>
    %515 = arith.addf %514, %513 : vector<2x32xf32>
    %516 = arith.divf %514, %515 : vector<2x32xf32>
    %517 = vector.extract_strided_slice %507 {offsets = [0, 32], sizes = [2, 32], strides = [1, 1]} : vector<2x96xf32> to vector<2x32xf32>
    %518 = vector.extract_strided_slice %508 {offsets = [0, 32], sizes = [2, 32], strides = [1, 1]} : vector<2x96xf32> to vector<2x32xf32>
    %519 = arith.addf %517, %518 : vector<2x32xf32>
    %520 = arith.negf %519 : vector<2x32xf32>
    %521 = math.exp %520 : vector<2x32xf32>
    %cst_130 = arith.constant 1.000000e+00 : f32
    %522 = vector.broadcast %cst_130 : f32 to vector<2x32xf32>
    %523 = arith.addf %522, %521 : vector<2x32xf32>
    %524 = arith.divf %522, %523 : vector<2x32xf32>
    %525 = vector.extract_strided_slice %507 {offsets = [0, 64], sizes = [2, 32], strides = [1, 1]} : vector<2x96xf32> to vector<2x32xf32>
    %526 = vector.extract_strided_slice %508 {offsets = [0, 64], sizes = [2, 32], strides = [1, 1]} : vector<2x96xf32> to vector<2x32xf32>
    %527 = arith.mulf %516, %526 : vector<2x32xf32>
    %528 = arith.addf %525, %527 : vector<2x32xf32>
    %529 = math.tanh %528 : vector<2x32xf32>
    %cst_131 = arith.constant 1.000000e+00 : f32
    %530 = vector.broadcast %cst_131 : f32 to vector<2x32xf32>
    %531 = arith.subf %530, %524 : vector<2x32xf32>
    %532 = arith.mulf %531, %529 : vector<2x32xf32>
    %533 = arith.mulf %524, %506 : vector<2x32xf32>
    %534 = arith.addf %532, %533 : vector<2x32xf32>
    %c6_i32 = arith.constant 6 : i32
    %535 = vector.broadcast %c6_i32 : i32 to vector<2x1xi32>
    %536 = arith.cmpi sgt, %306, %535 : vector<2x1xi32>
    %537 = vector.shape_cast %536 : vector<2x1xi1> to vector<2x1xi1>
    %538 = vector.broadcast %537 : vector<2x1xi1> to vector<2x32xi1>
    %539 = arith.select %538, %534, %506 : vector<2x32xi1>, vector<2x32xf32>
    %540 = vector.extract_strided_slice %307 {offsets = [14, 0], sizes = [2, 96], strides = [1, 1]} : vector<16x96xf32> to vector<2x96xf32>
    %cst_132 = arith.constant dense<0.000000e+00> : vector<2x96xf32>
    %541 = tpu.matmul %539, %305, %cst_132 {dimension_numbers = #tpu.dot_dimension_numbers<[1], [0], [0], [1], [0, 0, 1, 1], [], []>} : vector<2x32xf32>, vector<32x96xf32>, vector<2x96xf32> -> vector<2x96xf32>
    %542 = vector.extract_strided_slice %540 {offsets = [0, 0], sizes = [2, 32], strides = [1, 1]} : vector<2x96xf32> to vector<2x32xf32>
    %543 = vector.extract_strided_slice %541 {offsets = [0, 0], sizes = [2, 32], strides = [1, 1]} : vector<2x96xf32> to vector<2x32xf32>
    %544 = arith.addf %542, %543 : vector<2x32xf32>
    %545 = arith.negf %544 : vector<2x32xf32>
    %546 = math.exp %545 : vector<2x32xf32>
    %cst_133 = arith.constant 1.000000e+00 : f32
    %547 = vector.broadcast %cst_133 : f32 to vector<2x32xf32>
    %548 = arith.addf %547, %546 : vector<2x32xf32>
    %549 = arith.divf %547, %548 : vector<2x32xf32>
    %550 = vector.extract_strided_slice %540 {offsets = [0, 32], sizes = [2, 32], strides = [1, 1]} : vector<2x96xf32> to vector<2x32xf32>
    %551 = vector.extract_strided_slice %541 {offsets = [0, 32], sizes = [2, 32], strides = [1, 1]} : vector<2x96xf32> to vector<2x32xf32>
    %552 = arith.addf %550, %551 : vector<2x32xf32>
    %553 = arith.negf %552 : vector<2x32xf32>
    %554 = math.exp %553 : vector<2x32xf32>
    %cst_134 = arith.constant 1.000000e+00 : f32
    %555 = vector.broadcast %cst_134 : f32 to vector<2x32xf32>
    %556 = arith.addf %555, %554 : vector<2x32xf32>
    %557 = arith.divf %555, %556 : vector<2x32xf32>
    %558 = vector.extract_strided_slice %540 {offsets = [0, 64], sizes = [2, 32], strides = [1, 1]} : vector<2x96xf32> to vector<2x32xf32>
    %559 = vector.extract_strided_slice %541 {offsets = [0, 64], sizes = [2, 32], strides = [1, 1]} : vector<2x96xf32> to vector<2x32xf32>
    %560 = arith.mulf %549, %559 : vector<2x32xf32>
    %561 = arith.addf %558, %560 : vector<2x32xf32>
    %562 = math.tanh %561 : vector<2x32xf32>
    %cst_135 = arith.constant 1.000000e+00 : f32
    %563 = vector.broadcast %cst_135 : f32 to vector<2x32xf32>
    %564 = arith.subf %563, %557 : vector<2x32xf32>
    %565 = arith.mulf %564, %562 : vector<2x32xf32>
    %566 = arith.mulf %557, %539 : vector<2x32xf32>
    %567 = arith.addf %565, %566 : vector<2x32xf32>
    %c7_i32 = arith.constant 7 : i32
    %568 = vector.broadcast %c7_i32 : i32 to vector<2x1xi32>
    %569 = arith.cmpi sgt, %306, %568 : vector<2x1xi32>
    %570 = vector.shape_cast %569 : vector<2x1xi1> to vector<2x1xi1>
    %571 = vector.broadcast %570 : vector<2x1xi1> to vector<2x32xi1>
    %572 = arith.select %571, %567, %539 : vector<2x32xi1>, vector<2x32xf32>
    %c0_136 = arith.constant 0 : index
    %c0_137 = arith.constant 0 : index
    %573 = vector.load %arg10[%c0_136, %c0_137] : memref<4x32xf32, #tpu.memory_space<vmem>>, vector<2x32xf32>
    tpu.vector_store %arg10[%c0_136, %c0_137], %300 {strides = array<i32>} : memref<4x32xf32, #tpu.memory_space<vmem>>, vector<2x32xf32>,
    %c2_138 = arith.constant 2 : index
    %c0_139 = arith.constant 0 : index
    %574 = vector.load %arg10[%c2_138, %c0_139] : memref<4x32xf32, #tpu.memory_space<vmem>>, vector<2x32xf32>
    tpu.vector_store %arg10[%c2_138, %c0_139], %572 {strides = array<i32>} : memref<4x32xf32, #tpu.memory_space<vmem>>, vector<2x32xf32>,
    return
  }
}

</mosaic_0001>

<llo_original>
// kernel: exposure_model_forward.1
$region0: #{exposure_model_forward.1}
  #allocation0 [shape = 'u32[]', space=smem, size = 0x4, offset = 0x4, fixed_abs, tag = 'smem constant byte address 0x4 - core index']
  #allocation1 [shape = 'u32[72,128]{1,0:T(1,128)}', space=vmem, size = 0x9000, scoped, tag = 'internal scratch']
  %s0 = inlined_call_operand.vmem [shape: f32[16,32], index: 0, kind: input, shape index: {}]
  %s1 = inlined_call_operand.vmem [shape: f32[2,1,8], index: 1, kind: input, shape index: {}]
  %s2 = inlined_call_operand.vmem [shape: f32[4,32], index: 2, kind: input, shape index: {}]
  %s3 = inlined_call_operand.vmem [shape: f32[2,32,96], index: 3, kind: input, shape index: {}]
  %s4 = inlined_call_operand.vmem [shape: f32[2,1,96], index: 4, kind: input, shape index: {}]
  %s5 = inlined_call_operand.vmem [shape: f32[2,96,32], index: 5, kind: input, shape index: {}]
  %s6 = inlined_call_operand.vmem [shape: f32[2,8,32], index: 6, kind: input, shape index: {}]
  %s7 = inlined_call_operand.vmem [shape: f32[16,32], index: 7, kind: input, shape index: {}]
  %s8 = inlined_call_operand.vmem [shape: f32[2,32,96], index: 8, kind: input, shape index: {}]
  %s9 = inlined_call_operand.vmem [shape: s32[2,1], index: 9, kind: input, shape index: {}]
  %s10 = inlined_call_operand.vmem [shape: f32[4,32], index: 10, kind: output, shape index: {}]
  %s11 = sld [smem:[#allocation0]]
  $region50: #{exposure_model_forward.1} parent=0
    _
  %s13 = ssub.s32 1, %s11
  %s14 = scalar_select 0, %s13, %s11
  // Predicated region
  $region2: #{exposure_model_forward.1} parent=0 // pred_check
    _
  $region3: #{exposure_model_forward.1} parent=0 // pred_check_branch
    %16 = sbr.rel (0) target = $region5
  $region4: #{exposure_model_forward.1} parent=0 // pred_region
    _
  $region5: #{exposure_model_forward.1} parent=0 // pred_fallthru
    _
  // Predicated region
  $region6: #{exposure_model_forward.1} parent=0 // pred_check
    _
  $region7: #{exposure_model_forward.1} parent=0 // pred_check_branch
    %18 = sbr.rel (0) target = $region9
  $region8: #{exposure_model_forward.1} parent=0 // pred_region
    _
  $region9: #{exposure_model_forward.1} parent=0 // pred_fallthru
    _
  // Predicated region
  $region10: #{exposure_model_forward.1} parent=0 // pred_check
    _
  $region11: #{exposure_model_forward.1} parent=0 // pred_check_branch
    %20 = sbr.rel (0) target = $region13
  $region12: #{exposure_model_forward.1} parent=0 // pred_region
    _
  $region13: #{exposure_model_forward.1} parent=0 // pred_fallthru
    _
  // Predicated region
  $region14: #{exposure_model_forward.1} parent=0 // pred_check
    _
  $region15: #{exposure_model_forward.1} parent=0 // pred_check_branch
    %22 = sbr.rel (0) target = $region17
  $region16: #{exposure_model_forward.1} parent=0 // pred_region
    _
  $region17: #{exposure_model_forward.1} parent=0 // pred_fallthru
    _
  // Predicated region
  $region18: #{exposure_model_forward.1} parent=0 // pred_check
    _
  $region19: #{exposure_model_forward.1} parent=0 // pred_check_branch
    %24 = sbr.rel (0) target = $region21
  $region20: #{exposure_model_forward.1} parent=0 // pred_region
    _
  $region21: #{exposure_model_forward.1} parent=0 // pred_fallthru
    _
  // Predicated region
  $region22: #{exposure_model_forward.1} parent=0 // pred_check
    _
  $region23: #{exposure_model_forward.1} parent=0 // pred_check_branch
    %26 = sbr.rel (0) target = $region25
  $region24: #{exposure_model_forward.1} parent=0 // pred_region
    _
  $region25: #{exposure_model_forward.1} parent=0 // pred_fallthru
    _
  // Predicated region
  $region26: #{exposure_model_forward.1} parent=0 // pred_check
    _
  $region27: #{exposure_model_forward.1} parent=0 // pred_check_branch
    %28 = sbr.rel (0) target = $region29
  $region28: #{exposure_model_forward.1} parent=0 // pred_region
    _
  $region29: #{exposure_model_forward.1} parent=0 // pred_fallthru
    _
  // Predicated region
  $region30: #{exposure_model_forward.1} parent=0 // pred_check
    _
  $region31: #{exposure_model_forward.1} parent=0 // pred_check_branch
    %30 = sbr.rel (0) target = $region33
  $region32: #{exposure_model_forward.1} parent=0 // pred_region
    _
  $region33: #{exposure_model_forward.1} parent=0 // pred_fallthru
    _
  // Predicated region
  $region34: #{exposure_model_forward.1} parent=0 // pred_check
    _
  $region35: #{exposure_model_forward.1} parent=0 // pred_check_branch
    %32 = sbr.rel (0) target = $region37
  $region36: #{exposure_model_forward.1} parent=0 // pred_region
    _
  $region37: #{exposure_model_forward.1} parent=0 // pred_fallthru
    _
  // Predicated region
  $region38: #{exposure_model_forward.1} parent=0 // pred_check
    _
  $region39: #{exposure_model_forward.1} parent=0 // pred_check_branch
    %34 = sbr.rel (0) target = $region41
  $region40: #{exposure_model_forward.1} parent=0 // pred_region
    _
  $region41: #{exposure_model_forward.1} parent=0 // pred_fallthru
    _
  %v35 = vld [vmem:[%s0] sm:$0xff]
  %v36 = vld [vmem:[%s0 + $0x8] sm:$0xff]
  %v37 = vld [vmem:[%s2] sm:$0x1]
  %v38 = vld [vmem:[%s2 + $0x1] sm:$0x1]
  %vm39 = vcmask 261120
  %v40 = vsel %vm39, %v35, 0.0
  %41 = vadd.xlane.f32.xlu0 %v40
  %v42 = vpop.xlane.xlu0 %41
  %v43 = vsel %vm39, %v36, 0.0
  %44 = vadd.xlane.f32.xlu0 %v43
  %v45 = vpop.xlane.xlu0 %44
  %v46 = vrcp.pop 32.0
  %v47 = vmul.f32 32.0, %v46
  %v48 = vsub.f32 1.0, %v47
  %v49 = vmul.f32 %v46, %v48
  %v50 = vadd.f32 %v46, %v49
  %vm51 = vweird.f32 %v46
  %v52 = vsel %vm51, %v46, %v50
  %v53 = vmul.f32 %v42, %v52
  %v54 = vmul.f32 %v45, %v52
  %v55 = vsub.f32 %v35, %v53
  %v56 = vsub.f32 %v36, %v54
  %v57 = vmul.f32 %v55, %v55
  %v58 = vmul.f32 %v56, %v56
  %v59 = vsel %vm39, %v57, 0.0
  %60 = vadd.xlane.f32.xlu0 %v59
  %v61 = vpop.xlane.xlu0 %60
  %v62 = vsel %vm39, %v58, 0.0
  %63 = vadd.xlane.f32.xlu0 %v62
  %v64 = vpop.xlane.xlu0 %63
  %v65 = vmul.f32 %v61, %v52
  %v66 = vmul.f32 %v64, %v52
  %v67 = vadd.f32 %v65, 1e-12
  %v68 = vadd.f32 %v66, 1e-12
  %v69 = vrsqrt.pop %v67
  %v70 = vmul.f32 %v69, %v67
  %v71 = vmul.f32 %v70, %v69
  %v72 = vmul.f32 0.5, %v71
  %v73 = vsub.f32 1.5, %v72
  %v74 = vmul.f32 %v69, %v73
  %vm75 = vweird.f32 %v67
  %vm76 = vweird.f32 %v69
  %vm77 = vmor %vm75, %vm76
  %v78 = vsel %vm77, %v69, %v74
  %v79 = vrsqrt.pop %v68
  %v80 = vmul.f32 %v79, %v68
  %v81 = vmul.f32 %v80, %v79
  %v82 = vmul.f32 0.5, %v81
  %v83 = vsub.f32 1.5, %v82
  %v84 = vmul.f32 %v79, %v83
  %vm85 = vweird.f32 %v68
  %vm86 = vweird.f32 %v79
  %vm87 = vmor %vm85, %vm86
  %v88 = vsel %vm87, %v79, %v84
  %v89 = vmul.f32 %v55, %v78
  %v90 = vmul.f32 %v56, %v88
  %v91 = vperm.slane %v37, 0
  %v92 = vmul.f32 %v91, %v89
  %v93 = vmul.f32 %v91, %v90
  %v94 = vperm.slane %v38, 0
  %v95 = vadd.f32 %v92, %v94
  %v96 = vadd.f32 %v93, %v94
  %v97 = vld [vmem:[%s1] sm:$0x1]
  %v98 = vld [vmem:[%s1 + $0x1] sm:$0x1]
  %v99 = vld [vmem:[%s3] sm:$0xff]
  %v100 = vld [vmem:[%s3 + $0x8] sm:$0xff]
  %v101 = vld [vmem:[%s3 + $0x10] sm:$0xff]
  %v102 = vld [vmem:[%s3 + $0x18] sm:$0xff]
  %v103 = vld [vmem:[%s4] sm:$0x1]
  %v104 = vld [vmem:[%s5] sm:$0xff]
  %v105 = vld [vmem:[%s5 + $0x8] sm:$0xff]
  %v106 = vld [vmem:[%s5 + $0x10] sm:$0xff]
  %v107 = vld [vmem:[%s5 + $0x18] sm:$0xff]
  %v108 = vld [vmem:[%s5 + $0x20] sm:$0xff]
  %v109 = vld [vmem:[%s5 + $0x28] sm:$0xff]
  %v110 = vld [vmem:[%s5 + $0x30] sm:$0xff]
  %v111 = vld [vmem:[%s5 + $0x38] sm:$0xff]
  %v112 = vld [vmem:[%s5 + $0x40] sm:$0xff]
  %v113 = vld [vmem:[%s5 + $0x48] sm:$0xff]
  %v114 = vld [vmem:[%s5 + $0x50] sm:$0xff]
  %v115 = vld [vmem:[%s5 + $0x58] sm:$0xff]
  %v116 = vld [vmem:[%s6] sm:$0xff]
  %v118 = vperm.slane %v103, 0
  %v121 = vsel %vm39, %v95, 0
  %v124 = vsel %vm39, %v96, 0
  %126 = vmatpush.msra.mxu0 0.0
  %127 = vmatpush.msra.mxu0 0.0
  %128 = vmatpush.msra.mxu0 0.0
  %129 = vmatpush.msra.mxu0 0.0
  %130 = vmatpush.msra.mxu0 0.0
  %131 = vmatpush.msra.mxu0 0.0
  %132 = vmatpush.msra.mxu0 0.0
  %133 = vmatpush.msra.mxu0 0.0
  %134 = vmatpush.msra.mxu0 0.0
  %135 = vmatpush.msra.mxu0 0.0
  %136 = vmatpush.msra.mxu0 0.0
  %137 = vmatpush.msra.mxu0 0.0
  %138 = vmatpush.msra.mxu0 %v102
  %139 = vmatpush.msra.mxu0 %v101
  %140 = vmatpush.msra.mxu0 %v100
  %141 = vmatpush.msra.mxu0 %v99
  %142 = vmatmul.f32.gmra.mxu0 %v121
  %v143 = vpop.f32.mrf.mxu0
  %v144 = vadd.f32 %v118, %v143
  %145 = vmatmul.f32.gmra.mxu0 %v124
  %v146 = vpop.f32.mrf.mxu0
  %v147 = vadd.f32 %v118, %v146
  %148 = vdwg.mxu0
  %150 = vrot.lane.b32.xlu0 %v144, 96
  %v151 = vpop.permute.xlu0 %150
  %vm152 = vcmask 130048
  %v153 = vsel %vm152, %v144, 0
  %v155 = vsel %vm152, %v151, 0
  %157 = vmatpush.xpose.msra.mxu0 0.0
  %158 = vmatpush.xpose.msra.mxu0 0.0
  %159 = vmatpush.xpose.msra.mxu0 0.0
  %160 = vmatpush.xpose.msra.mxu0 0.0
  %161 = vmatpush.xpose.msra.mxu0 0.0
  %162 = vmatpush.xpose.msra.mxu0 0.0
  %163 = vmatpush.xpose.msra.mxu0 0.0
  %164 = vmatpush.xpose.msra.mxu0 0.0
  %165 = vmatpush.xpose.msra.mxu0 0.0
  %166 = vmatpush.xpose.msra.mxu0 0.0
  %167 = vmatpush.xpose.msra.mxu0 0.0
  %168 = vmatpush.xpose.msra.mxu0 0.0
  %169 = vmatpush.xpose.msra.mxu0 0.0
  %170 = vmatpush.xpose.msra.mxu0 0.0
  %171 = vmatpush.xpose.msra.mxu0 0.0
  %172 = vmatpush.xpose.msra.mxu0 %v155
  %173 = vmatmul.f32.gmra.mxu0 %v153
  %v174 = vpop.f32.mrf.mxu0
  %v175 = vadd.f32 0.0, %v174
  %176 = vdwg.mxu0
  %178 = vrot.lane.b32.xlu0 %v147, 96
  %v179 = vpop.permute.xlu0 %178
  %v180 = vsel %vm152, %v147, 0
  %v182 = vsel %vm152, %v179, 0
  %184 = vmatpush.xpose.msra.mxu0 0.0
  %185 = vmatpush.xpose.msra.mxu0 0.0
  %186 = vmatpush.xpose.msra.mxu0 0.0
  %187 = vmatpush.xpose.msra.mxu0 0.0
  %188 = vmatpush.xpose.msra.mxu0 0.0
  %189 = vmatpush.xpose.msra.mxu0 0.0
  %190 = vmatpush.xpose.msra.mxu0 0.0
  %191 = vmatpush.xpose.msra.mxu0 0.0
  %192 = vmatpush.xpose.msra.mxu0 0.0
  %193 = vmatpush.xpose.msra.mxu0 0.0
  %194 = vmatpush.xpose.msra.mxu0 0.0
  %195 = vmatpush.xpose.msra.mxu0 0.0
  %196 = vmatpush.xpose.msra.mxu0 0.0
  %197 = vmatpush.xpose.msra.mxu0 0.0
  %198 = vmatpush.xpose.msra.mxu0 0.0
  %199 = vmatpush.xpose.msra.mxu0 %v182
  %200 = vmatmul.f32.gmra.mxu0 %v180
  %v201 = vpop.f32.mrf.mxu0
  %v202 = vadd.f32 0.0, %v201
  %203 = vdwg.mxu0
  %v204 = vmul.f32 %v175, 0.25
  %v205 = vmul.f32 %v202, 0.25
  %v208 = vperm.slane %v97, 0
  %v209 = vperm.slane %v98, 0
  %v212 = vadd.f32 %v204, %v208
  %v213 = vadd.f32 %v205, %v209
  %vm214 = vcmask 64512
  %v215 = vsel %vm214, %v212, -inf
  %216 = vmax.xlane.f32.xlu0 %v215
  %v217 = vpop.xlane.xlu0 %216
  %v218 = vsel %vm214, %v213, -inf
  %219 = vmax.xlane.f32.xlu0 %v218
  %v220 = vpop.xlane.xlu0 %219
  %v221 = vsub.f32 %v212, %v217
  %v222 = vsub.f32 %v213, %v220
  %v223 = vmul.f32 %v221, 1.442695
  %v224 = vpow.pop %v223
  %v225 = vmul.f32 %v222, 1.442695
  %v226 = vpow.pop %v225
  %v227 = vsel %vm214, %v224, 0.0
  %228 = vadd.xlane.f32.xlu0 %v227
  %v229 = vpop.xlane.xlu0 %228
  %v230 = vsel %vm214, %v226, 0.0
  %231 = vadd.xlane.f32.xlu0 %v230
  %v232 = vpop.xlane.xlu0 %231
  %v233 = vrcp.pop %v229
  %v234 = vrcp.pop %v232
  %v235 = vmul.f32 %v224, %v233
  %v236 = vmul.f32 %v226, %v234
  %237 = vrot.lane.b32.xlu0 %v144, 64
  %v238 = vpop.permute.xlu0 %237
  %v241 = vsel %vm214, %v235, 0
  %243 = vmatpush.msra.mxu0 0.0
  %244 = vmatpush.msra.mxu0 0.0
  %245 = vmatpush.msra.mxu0 0.0
  %246 = vmatpush.msra.mxu0 0.0
  %247 = vmatpush.msra.mxu0 0.0
  %248 = vmatpush.msra.mxu0 0.0
  %249 = vmatpush.msra.mxu0 0.0
  %250 = vmatpush.msra.mxu0 0.0
  %251 = vmatpush.msra.mxu0 0.0
  %252 = vmatpush.msra.mxu0 0.0
  %253 = vmatpush.msra.mxu0 0.0
  %254 = vmatpush.msra.mxu0 0.0
  %255 = vmatpush.msra.mxu0 0.0
  %256 = vmatpush.msra.mxu0 0.0
  %257 = vmatpush.msra.mxu0 0.0
  %258 = vmatpush.msra.mxu0 %v238
  %259 = vmatmul.f32.gmra.mxu0 %v241
  %v260 = vpop.f32.mrf.mxu0
  %v261 = vadd.f32 0.0, %v260
  %262 = vdwg.mxu0
  %263 = vrot.lane.b32.xlu0 %v147, 64
  %v264 = vpop.permute.xlu0 %263
  %v267 = vsel %vm214, %v236, 0
  %269 = vmatpush.msra.mxu0 0.0
  %270 = vmatpush.msra.mxu0 0.0
  %271 = vmatpush.msra.mxu0 0.0
  %272 = vmatpush.msra.mxu0 0.0
  %273 = vmatpush.msra.mxu0 0.0
  %274 = vmatpush.msra.mxu0 0.0
  %275 = vmatpush.msra.mxu0 0.0
  %276 = vmatpush.msra.mxu0 0.0
  %277 = vmatpush.msra.mxu0 0.0
  %278 = vmatpush.msra.mxu0 0.0
  %279 = vmatpush.msra.mxu0 0.0
  %280 = vmatpush.msra.mxu0 0.0
  %281 = vmatpush.msra.mxu0 0.0
  %282 = vmatpush.msra.mxu0 0.0
  %283 = vmatpush.msra.mxu0 0.0
  %284 = vmatpush.msra.mxu0 %v264
  %285 = vmatmul.f32.gmra.mxu0 %v267
  %v286 = vpop.f32.mrf.mxu0
  %v287 = vadd.f32 0.0, %v286
  %288 = vdwg.mxu0
  %289 = vrot.lane.b32.xlu0 %v144, 112
  %v290 = vpop.permute.xlu0 %289
  %291 = vrot.lane.b32.xlu0 %v144, 80
  %v292 = vpop.permute.xlu0 %291
  %v293 = vsel %vm152, %v290, 0
  %v295 = vsel %vm152, %v292, 0
  %297 = vmatpush.xpose.msra.mxu0 0.0
  %298 = vmatpush.xpose.msra.mxu0 0.0
  %299 = vmatpush.xpose.msra.mxu0 0.0
  %300 = vmatpush.xpose.msra.mxu0 0.0
  %301 = vmatpush.xpose.msra.mxu0 0.0
  %302 = vmatpush.xpose.msra.mxu0 0.0
  %303 = vmatpush.xpose.msra.mxu0 0.0
  %304 = vmatpush.xpose.msra.mxu0 0.0
  %305 = vmatpush.xpose.msra.mxu0 0.0
  %306 = vmatpush.xpose.msra.mxu0 0.0
  %307 = vmatpush.xpose.msra.mxu0 0.0
  %308 = vmatpush.xpose.msra.mxu0 0.0
  %309 = vmatpush.xpose.msra.mxu0 0.0
  %310 = vmatpush.xpose.msra.mxu0 0.0
  %311 = vmatpush.xpose.msra.mxu0 0.0
  %312 = vmatpush.xpose.msra.mxu0 %v295
  %313 = vmatmul.f32.gmra.mxu0 %v293
  %v314 = vpop.f32.mrf.mxu0
  %v315 = vadd.f32 0.0, %v314
  %316 = vdwg.mxu0
  %317 = vrot.lane.b32.xlu0 %v147, 112
  %v318 = vpop.permute.xlu0 %317
  %319 = vrot.lane.b32.xlu0 %v147, 80
  %v320 = vpop.permute.xlu0 %319
  %v321 = vsel %vm152, %v318, 0
  %v323 = vsel %vm152, %v320, 0
  %325 = vmatpush.xpose.msra.mxu0 0.0
  %326 = vmatpush.xpose.msra.mxu0 0.0
  %327 = vmatpush.xpose.msra.mxu0 0.0
  %328 = vmatpush.xpose.msra.mxu0 0.0
  %329 = vmatpush.xpose.msra.mxu0 0.0
  %330 = vmatpush.xpose.msra.mxu0 0.0
  %331 = vmatpush.xpose.msra.mxu0 0.0
  %332 = vmatpush.xpose.msra.mxu0 0.0
  %333 = vmatpush.xpose.msra.mxu0 0.0
  %334 = vmatpush.xpose.msra.mxu0 0.0
  %335 = vmatpush.xpose.msra.mxu0 0.0
  %336 = vmatpush.xpose.msra.mxu0 0.0
  %337 = vmatpush.xpose.msra.mxu0 0.0
  %338 = vmatpush.xpose.msra.mxu0 0.0
  %339 = vmatpush.xpose.msra.mxu0 0.0
  %340 = vmatpush.xpose.msra.mxu0 %v323
  %341 = vmatmul.f32.gmra.mxu0 %v321
  %v342 = vpop.f32.mrf.mxu0
  %v343 = vadd.f32 0.0, %v342
  %344 = vdwg.mxu0
  %v345 = vmul.f32 %v315, 0.25
  %v346 = vmul.f32 %v343, 0.25
  %v347 = vadd.f32 %v345, %v208
  %v348 = vadd.f32 %v346, %v209
  %v349 = vsel %vm214, %v347, -inf
  %350 = vmax.xlane.f32.xlu0 %v349
  %v351 = vpop.xlane.xlu0 %350
  %v352 = vsel %vm214, %v348, -inf
  %353 = vmax.xlane.f32.xlu0 %v352
  %v354 = vpop.xlane.xlu0 %353
  %v355 = vsub.f32 %v347, %v351
  %v356 = vsub.f32 %v348, %v354
  %v357 = vmul.f32 %v355, 1.442695
  %v358 = vpow.pop %v357
  %v359 = vmul.f32 %v356, 1.442695
  %v360 = vpow.pop %v359
  %v361 = vsel %vm214, %v358, 0.0
  %362 = vadd.xlane.f32.xlu0 %v361
  %v363 = vpop.xlane.xlu0 %362
  %v364 = vsel %vm214, %v360, 0.0
  %365 = vadd.xlane.f32.xlu0 %v364
  %v366 = vpop.xlane.xlu0 %365
  %v367 = vrcp.pop %v363
  %v368 = vrcp.pop %v366
  %v369 = vmul.f32 %v358, %v367
  %v370 = vmul.f32 %v360, %v368
  %371 = vrot.lane.b32.xlu0 %v144, 48
  %v372 = vpop.permute.xlu0 %371
  %v375 = vsel %vm214, %v369, 0
  %377 = vmatpush.msra.mxu0 0.0
  %378 = vmatpush.msra.mxu0 0.0
  %379 = vmatpush.msra.mxu0 0.0
  %380 = vmatpush.msra.mxu0 0.0
  %381 = vmatpush.msra.mxu0 0.0
  %382 = vmatpush.msra.mxu0 0.0
  %383 = vmatpush.msra.mxu0 0.0
  %384 = vmatpush.msra.mxu0 0.0
  %385 = vmatpush.msra.mxu0 0.0
  %386 = vmatpush.msra.mxu0 0.0
  %387 = vmatpush.msra.mxu0 0.0
  %388 = vmatpush.msra.mxu0 0.0
  %389 = vmatpush.msra.mxu0 0.0
  %390 = vmatpush.msra.mxu0 0.0
  %391 = vmatpush.msra.mxu0 0.0
  %392 = vmatpush.msra.mxu0 %v372
  %393 = vmatmul.f32.gmra.mxu0 %v375
  %v394 = vpop.f32.mrf.mxu0
  %v395 = vadd.f32 0.0, %v394
  %396 = vdwg.mxu0
  %397 = vrot.lane.b32.xlu0 %v147, 48
  %v398 = vpop.permute.xlu0 %397
  %v401 = vsel %vm214, %v370, 0
  %403 = vmatpush.msra.mxu0 0.0
  %404 = vmatpush.msra.mxu0 0.0
  %405 = vmatpush.msra.mxu0 0.0
  %406 = vmatpush.msra.mxu0 0.0
  %407 = vmatpush.msra.mxu0 0.0
  %408 = vmatpush.msra.mxu0 0.0
  %409 = vmatpush.msra.mxu0 0.0
  %410 = vmatpush.msra.mxu0 0.0
  %411 = vmatpush.msra.mxu0 0.0
  %412 = vmatpush.msra.mxu0 0.0
  %413 = vmatpush.msra.mxu0 0.0
  %414 = vmatpush.msra.mxu0 0.0
  %415 = vmatpush.msra.mxu0 0.0
  %416 = vmatpush.msra.mxu0 0.0
  %417 = vmatpush.msra.mxu0 0.0
  %418 = vmatpush.msra.mxu0 %v398
  %419 = vmatmul.f32.gmra.mxu0 %v401
  %v420 = vpop.f32.mrf.mxu0
  %v421 = vadd.f32 0.0, %v420
  %422 = vdwg.mxu0
  %425 = vrot.lane.b32.xlu0 %v395, 16
  %v426 = vpop.permute.xlu0 %425
  %427 = vrot.lane.b32.xlu0 %v421, 16
  %v428 = vpop.permute.xlu0 %427
  %v431 = vsel %vm152, %v261, %v426
  %v432 = vsel %vm152, %v287, %v428
  %v433 = vperm.slane %v116, 0
  %v435 = vsel %vm39, %v431, 0
  %v438 = vsel %vm39, %v432, 0
  %440 = vmatpush.msra.mxu0 0.0
  %441 = vmatpush.msra.mxu0 0.0
  %442 = vmatpush.msra.mxu0 0.0
  %443 = vmatpush.msra.mxu0 0.0
  %444 = vmatpush.msra.mxu0 0.0
  %445 = vmatpush.msra.mxu0 0.0
  %446 = vmatpush.msra.mxu0 0.0
  %447 = vmatpush.msra.mxu0 0.0
  %448 = vmatpush.msra.mxu0 0.0
  %449 = vmatpush.msra.mxu0 0.0
  %450 = vmatpush.msra.mxu0 0.0
  %451 = vmatpush.msra.mxu0 0.0
  %452 = vmatpush.msra.mxu0 %v107
  %453 = vmatpush.msra.mxu0 %v106
  %454 = vmatpush.msra.mxu0 %v105
  %455 = vmatpush.msra.mxu0 %v104
  %456 = vmatmul.f32.gmra.mxu0 %v435
  %v457 = vpop.f32.mrf.mxu0
  %v458 = vadd.f32 %v433, %v457
  %459 = vmatmul.f32.gmra.mxu0 %v438
  %v460 = vpop.f32.mrf.mxu0
  %v461 = vadd.f32 %v433, %v460
  %462 = vdwg.mxu0
  %v463 = vadd.f32 %v95, %v458
  %v464 = vadd.f32 %v96, %v461
  %v465 = vsel %vm39, %v463, 0.0
  %466 = vadd.xlane.f32.xlu0 %v465
  %v467 = vpop.xlane.xlu0 %466
  %v468 = vsel %vm39, %v464, 0.0
  %469 = vadd.xlane.f32.xlu0 %v468
  %v470 = vpop.xlane.xlu0 %469
  %v471 = vmul.f32 %v467, %v52
  %v472 = vmul.f32 %v470, %v52
  %v473 = vsub.f32 %v463, %v471
  %v474 = vsub.f32 %v464, %v472
  %v475 = vmul.f32 %v473, %v473
  %v476 = vmul.f32 %v474, %v474
  %v477 = vsel %vm39, %v475, 0.0
  %478 = vadd.xlane.f32.xlu0 %v477
  %v479 = vpop.xlane.xlu0 %478
  %v480 = vsel %vm39, %v476, 0.0
  %481 = vadd.xlane.f32.xlu0 %v480
  %v482 = vpop.xlane.xlu0 %481
  %v483 = vmul.f32 %v479, %v52
  %v484 = vmul.f32 %v482, %v52
  %v485 = vadd.f32 %v483, 1e-05
  %v486 = vadd.f32 %v484, 1e-05
  %v487 = vrsqrt.pop %v485
  %v488 = vmul.f32 %v487, %v485
  %v489 = vmul.f32 %v488, %v487
  %v490 = vmul.f32 0.5, %v489
  %v491 = vsub.f32 1.5, %v490
  %v492 = vmul.f32 %v487, %v491
  %vm493 = vweird.f32 %v485
  %vm494 = vweird.f32 %v487
  %vm495 = vmor %vm493, %vm494
  %v496 = vsel %vm495, %v487, %v492
  %v497 = vrsqrt.pop %v486
  %v498 = vmul.f32 %v497, %v486
  %v499 = vmul.f32 %v498, %v497
  %v500 = vmul.f32 0.5, %v499
  %v501 = vsub.f32 1.5, %v500
  %v502 = vmul.f32 %v497, %v501
  %vm503 = vweird.f32 %v486
  %vm504 = vweird.f32 %v497
  %vm505 = vmor %vm503, %vm504
  %v506 = vsel %vm505, %v497, %v502
  %v507 = vmul.f32 %v473, %v496
  %v508 = vmul.f32 %v474, %v506
  %v509 = vperm.slane %v116, 3
  %v510 = vmul.f32 %v509, %v507
  %v511 = vmul.f32 %v509, %v508
  %v512 = vperm.slane %v116, 4
  %v513 = vadd.f32 %v510, %v512
  %v514 = vadd.f32 %v511, %v512
  %v515 = vperm.slane %v116, 1
  %v517 = vsel %vm39, %v513, 0
  %v520 = vsel %vm39, %v514, 0
  %522 = vmatpush.msra.mxu0 0.0
  %523 = vmatpush.msra.mxu0 0.0
  %524 = vmatpush.msra.mxu0 0.0
  %525 = vmatpush.msra.mxu0 0.0
  %526 = vmatpush.msra.mxu0 0.0
  %527 = vmatpush.msra.mxu0 0.0
  %528 = vmatpush.msra.mxu0 0.0
  %529 = vmatpush.msra.mxu0 0.0
  %530 = vmatpush.msra.mxu0 0.0
  %531 = vmatpush.msra.mxu0 0.0
  %532 = vmatpush.msra.mxu0 0.0
  %533 = vmatpush.msra.mxu0 0.0
  %534 = vmatpush.msra.mxu0 %v111
  %535 = vmatpush.msra.mxu0 %v110
  %536 = vmatpush.msra.mxu0 %v109
  %537 = vmatpush.msra.mxu0 %v108
  %538 = vmatmul.f32.gmra.mxu0 %v517
  %v539 = vpop.f32.mrf.mxu0
  %v540 = vadd.f32 %v515, %v539
  %541 = vmatmul.f32.gmra.mxu0 %v520
  %v542 = vpop.f32.mrf.mxu0
  %v543 = vadd.f32 %v515, %v542
  %544 = vdwg.mxu0
  %v545 = vmax.f32 %v540, 0.0
  %v546 = vmax.f32 %v543, 0.0
  %v547 = vperm.slane %v116, 2
  %v549 = vsel %vm39, %v545, 0
  %v552 = vsel %vm39, %v546, 0
  %554 = vmatpush.msra.mxu0 0.0
  %555 = vmatpush.msra.mxu0 0.0
  %556 = vmatpush.msra.mxu0 0.0
  %557 = vmatpush.msra.mxu0 0.0
  %558 = vmatpush.msra.mxu0 0.0
  %559 = vmatpush.msra.mxu0 0.0
  %560 = vmatpush.msra.mxu0 0.0
  %561 = vmatpush.msra.mxu0 0.0
  %562 = vmatpush.msra.mxu0 0.0
  %563 = vmatpush.msra.mxu0 0.0
  %564 = vmatpush.msra.mxu0 0.0
  %565 = vmatpush.msra.mxu0 0.0
  %566 = vmatpush.msra.mxu0 %v115
  %567 = vmatpush.msra.mxu0 %v114
  %568 = vmatpush.msra.mxu0 %v113
  %569 = vmatpush.msra.mxu0 %v112
  %570 = vmatmul.f32.gmra.mxu0 %v549
  %v571 = vpop.f32.mrf.mxu0
  %v572 = vadd.f32 %v547, %v571
  %573 = vmatmul.f32.gmra.mxu0 %v552
  %v574 = vpop.f32.mrf.mxu0
  %v575 = vadd.f32 %v547, %v574
  %576 = vdwg.mxu0
  %v577 = vadd.f32 %v513, %v572
  %v578 = vadd.f32 %v514, %v575
  %v579 = vsel %vm39, %v577, 0.0
  %580 = vadd.xlane.f32.xlu0 %v579
  %v581 = vpop.xlane.xlu0 %580
  %v582 = vsel %vm39, %v578, 0.0
  %583 = vadd.xlane.f32.xlu0 %v582
  %v584 = vpop.xlane.xlu0 %583
  %v585 = vmul.f32 %v581, %v52
  %v586 = vmul.f32 %v584, %v52
  %v587 = vsub.f32 %v577, %v585
  %v588 = vsub.f32 %v578, %v586
  %v589 = vmul.f32 %v587, %v587
  %v590 = vmul.f32 %v588, %v588
  %v591 = vsel %vm39, %v589, 0.0
  %592 = vadd.xlane.f32.xlu0 %v591
  %v593 = vpop.xlane.xlu0 %592
  %v594 = vsel %vm39, %v590, 0.0
  %595 = vadd.xlane.f32.xlu0 %v594
  %v596 = vpop.xlane.xlu0 %595
  %v597 = vmul.f32 %v593, %v52
  %v598 = vmul.f32 %v596, %v52
  %v599 = vadd.f32 %v597, 1e-05
  %v600 = vadd.f32 %v598, 1e-05
  %v601 = vrsqrt.pop %v599
  %v602 = vmul.f32 %v601, %v599
  %v603 = vmul.f32 %v602, %v601
  %v604 = vmul.f32 0.5, %v603
  %v605 = vsub.f32 1.5, %v604
  %v606 = vmul.f32 %v601, %v605
  %vm607 = vweird.f32 %v599
  %vm608 = vweird.f32 %v601
  %vm609 = vmor %vm607, %vm608
  %v610 = vsel %vm609, %v601, %v606
  %v611 = vrsqrt.pop %v600
  %v612 = vmul.f32 %v611, %v600
  %v613 = vmul.f32 %v612, %v611
  %v614 = vmul.f32 0.5, %v613
  %v615 = vsub.f32 1.5, %v614
  %v616 = vmul.f32 %v611, %v615
  %vm617 = vweird.f32 %v600
  %vm618 = vweird.f32 %v611
  %vm619 = vmor %vm617, %vm618
  %v620 = vsel %vm619, %v611, %v616
  %v621 = vmul.f32 %v587, %v610
  %v622 = vmul.f32 %v588, %v620
  %v623 = vperm.slane %v116, 5
  %v624 = vmul.f32 %v623, %v621
  %v625 = vmul.f32 %v623, %v622
  %v626 = vperm.slane %v116, 6
  %v627 = vadd.f32 %v624, %v626
  %v628 = vadd.f32 %v625, %v626
  %s629 = scalar_lea.vmem %s3, 32
  %v630 = vld [vmem:[%s629] sm:$0xff]
  %v631 = vld [vmem:[%s629 + $0x8] sm:$0xff]
  %v632 = vld [vmem:[%s629 + $0x10] sm:$0xff]
  %v633 = vld [vmem:[%s629 + $0x18] sm:$0xff]
  %s634 = scalar_lea.vmem %s4, 1
  %v635 = vld [vmem:[%s634] sm:$0x1]
  %s636 = scalar_lea.vmem %s5, 96
  %v637 = vld [vmem:[%s636] sm:$0xff]
  %v638 = vld [vmem:[%s636 + $0x8] sm:$0xff]
  %v639 = vld [vmem:[%s636 + $0x10] sm:$0xff]
  %v640 = vld [vmem:[%s636 + $0x18] sm:$0xff]
  %v641 = vld [vmem:[%s636 + $0x20] sm:$0xff]
  %v642 = vld [vmem:[%s636 + $0x28] sm:$0xff]
  %v643 = vld [vmem:[%s636 + $0x30] sm:$0xff]
  %v644 = vld [vmem:[%s636 + $0x38] sm:$0xff]
  %v645 = vld [vmem:[%s636 + $0x40] sm:$0xff]
  %v646 = vld [vmem:[%s636 + $0x48] sm:$0xff]
  %v647 = vld [vmem:[%s636 + $0x50] sm:$0xff]
  %v648 = vld [vmem:[%s636 + $0x58] sm:$0xff]
  %s649 = scalar_lea.vmem %s6, 8
  %v650 = vld [vmem:[%s649] sm:$0xff]
  %v652 = vperm.slane %v635, 0
  %v655 = vsel %vm39, %v627, 0
  %v658 = vsel %vm39, %v628, 0
  %660 = vmatpush.msra.mxu0 0.0
  %661 = vmatpush.msra.mxu0 0.0
  %662 = vmatpush.msra.mxu0 0.0
  %663 = vmatpush.msra.mxu0 0.0
  %664 = vmatpush.msra.mxu0 0.0
  %665 = vmatpush.msra.mxu0 0.0
  %666 = vmatpush.msra.mxu0 0.0
  %667 = vmatpush.msra.mxu0 0.0
  %668 = vmatpush.msra.mxu0 0.0
  %669 = vmatpush.msra.mxu0 0.0
  %670 = vmatpush.msra.mxu0 0.0
  %671 = vmatpush.msra.mxu0 0.0
  %672 = vmatpush.msra.mxu0 %v633
  %673 = vmatpush.msra.mxu0 %v632
  %674 = vmatpush.msra.mxu0 %v631
  %675 = vmatpush.msra.mxu0 %v630
  %676 = vmatmul.f32.gmra.mxu0 %v655
  %v677 = vpop.f32.mrf.mxu0
  %v678 = vadd.f32 %v652, %v677
  %679 = vmatmul.f32.gmra.mxu0 %v658
  %v680 = vpop.f32.mrf.mxu0
  %v681 = vadd.f32 %v652, %v680
  %682 = vdwg.mxu0
  %684 = vrot.lane.b32.xlu0 %v678, 96
  %v685 = vpop.permute.xlu0 %684
  %v686 = vsel %vm152, %v678, 0
  %v688 = vsel %vm152, %v685, 0
  %690 = vmatpush.xpose.msra.mxu0 0.0
  %691 = vmatpush.xpose.msra.mxu0 0.0
  %692 = vmatpush.xpose.msra.mxu0 0.0
  %693 = vmatpush.xpose.msra.mxu0 0.0
  %694 = vmatpush.xpose.msra.mxu0 0.0
  %695 = vmatpush.xpose.msra.mxu0 0.0
  %696 = vmatpush.xpose.msra.mxu0 0.0
  %697 = vmatpush.xpose.msra.mxu0 0.0
  %698 = vmatpush.xpose.msra.mxu0 0.0
  %699 = vmatpush.xpose.msra.mxu0 0.0
  %700 = vmatpush.xpose.msra.mxu0 0.0
  %701 = vmatpush.xpose.msra.mxu0 0.0
  %702 = vmatpush.xpose.msra.mxu0 0.0
  %703 = vmatpush.xpose.msra.mxu0 0.0
  %704 = vmatpush.xpose.msra.mxu0 0.0
  %705 = vmatpush.xpose.msra.mxu0 %v688
  %706 = vmatmul.f32.gmra.mxu0 %v686
  %v707 = vpop.f32.mrf.mxu0
  %v708 = vadd.f32 0.0, %v707
  %709 = vdwg.mxu0
  %711 = vrot.lane.b32.xlu0 %v681, 96
  %v712 = vpop.permute.xlu0 %711
  %v713 = vsel %vm152, %v681, 0
  %v715 = vsel %vm152, %v712, 0
  %717 = vmatpush.xpose.msra.mxu0 0.0
  %718 = vmatpush.xpose.msra.mxu0 0.0
  %719 = vmatpush.xpose.msra.mxu0 0.0
  %720 = vmatpush.xpose.msra.mxu0 0.0
  %721 = vmatpush.xpose.msra.mxu0 0.0
  %722 = vmatpush.xpose.msra.mxu0 0.0
  %723 = vmatpush.xpose.msra.mxu0 0.0
  %724 = vmatpush.xpose.msra.mxu0 0.0
  %725 = vmatpush.xpose.msra.mxu0 0.0
  %726 = vmatpush.xpose.msra.mxu0 0.0
  %727 = vmatpush.xpose.msra.mxu0 0.0
  %728 = vmatpush.xpose.msra.mxu0 0.0
  %729 = vmatpush.xpose.msra.mxu0 0.0
  %730 = vmatpush.xpose.msra.mxu0 0.0
  %731 = vmatpush.xpose.msra.mxu0 0.0
  %732 = vmatpush.xpose.msra.mxu0 %v715
  %733 = vmatmul.f32.gmra.mxu0 %v713
  %v734 = vpop.f32.mrf.mxu0
  %v735 = vadd.f32 0.0, %v734
  %736 = vdwg.mxu0
  %v737 = vmul.f32 %v708, 0.25
  %v738 = vmul.f32 %v735, 0.25
  %v739 = vadd.f32 %v737, %v208
  %v740 = vadd.f32 %v738, %v209
  %v741 = vsel %vm214, %v739, -inf
  %742 = vmax.xlane.f32.xlu0 %v741
  %v743 = vpop.xlane.xlu0 %742
  %v744 = vsel %vm214, %v740, -inf
  %745 = vmax.xlane.f32.xlu0 %v744
  %v746 = vpop.xlane.xlu0 %745
  %v747 = vsub.f32 %v739, %v743
  %v748 = vsub.f32 %v740, %v746
  %v749 = vmul.f32 %v747, 1.442695
  %v750 = vpow.pop %v749
  %v751 = vmul.f32 %v748, 1.442695
  %v752 = vpow.pop %v751
  %v753 = vsel %vm214, %v750, 0.0
  %754 = vadd.xlane.f32.xlu0 %v753
  %v755 = vpop.xlane.xlu0 %754
  %v756 = vsel %vm214, %v752, 0.0
  %757 = vadd.xlane.f32.xlu0 %v756
  %v758 = vpop.xlane.xlu0 %757
  %v759 = vrcp.pop %v755
  %v760 = vrcp.pop %v758
  %v761 = vmul.f32 %v750, %v759
  %v762 = vmul.f32 %v752, %v760
  %763 = vrot.lane.b32.xlu0 %v678, 64
  %v764 = vpop.permute.xlu0 %763
  %v767 = vsel %vm214, %v761, 0
  %769 = vmatpush.msra.mxu0 0.0
  %770 = vmatpush.msra.mxu0 0.0
  %771 = vmatpush.msra.mxu0 0.0
  %772 = vmatpush.msra.mxu0 0.0
  %773 = vmatpush.msra.mxu0 0.0
  %774 = vmatpush.msra.mxu0 0.0
  %775 = vmatpush.msra.mxu0 0.0
  %776 = vmatpush.msra.mxu0 0.0
  %777 = vmatpush.msra.mxu0 0.0
  %778 = vmatpush.msra.mxu0 0.0
  %779 = vmatpush.msra.mxu0 0.0
  %780 = vmatpush.msra.mxu0 0.0
  %781 = vmatpush.msra.mxu0 0.0
  %782 = vmatpush.msra.mxu0 0.0
  %783 = vmatpush.msra.mxu0 0.0
  %784 = vmatpush.msra.mxu0 %v764
  %785 = vmatmul.f32.gmra.mxu0 %v767
  %v786 = vpop.f32.mrf.mxu0
  %v787 = vadd.f32 0.0, %v786
  %788 = vdwg.mxu0
  %789 = vrot.lane.b32.xlu0 %v681, 64
  %v790 = vpop.permute.xlu0 %789
  %v793 = vsel %vm214, %v762, 0
  %795 = vmatpush.msra.mxu0 0.0
  %796 = vmatpush.msra.mxu0 0.0
  %797 = vmatpush.msra.mxu0 0.0
  %798 = vmatpush.msra.mxu0 0.0
  %799 = vmatpush.msra.mxu0 0.0
  %800 = vmatpush.msra.mxu0 0.0
  %801 = vmatpush.msra.mxu0 0.0
  %802 = vmatpush.msra.mxu0 0.0
  %803 = vmatpush.msra.mxu0 0.0
  %804 = vmatpush.msra.mxu0 0.0
  %805 = vmatpush.msra.mxu0 0.0
  %806 = vmatpush.msra.mxu0 0.0
  %807 = vmatpush.msra.mxu0 0.0
  %808 = vmatpush.msra.mxu0 0.0
  %809 = vmatpush.msra.mxu0 0.0
  %810 = vmatpush.msra.mxu0 %v790
  %811 = vmatmul.f32.gmra.mxu0 %v793
  %v812 = vpop.f32.mrf.mxu0
  %v813 = vadd.f32 0.0, %v812
  %814 = vdwg.mxu0
  %815 = vrot.lane.b32.xlu0 %v678, 112
  %v816 = vpop.permute.xlu0 %815
  %817 = vrot.lane.b32.xlu0 %v678, 80
  %v818 = vpop.permute.xlu0 %817
  %v819 = vsel %vm152, %v816, 0
  %v821 = vsel %vm152, %v818, 0
  %823 = vmatpush.xpose.msra.mxu0 0.0
  %824 = vmatpush.xpose.msra.mxu0 0.0
  %825 = vmatpush.xpose.msra.mxu0 0.0
  %826 = vmatpush.xpose.msra.mxu0 0.0
  %827 = vmatpush.xpose.msra.mxu0 0.0
  %828 = vmatpush.xpose.msra.mxu0 0.0
  %829 = vmatpush.xpose.msra.mxu0 0.0
  %830 = vmatpush.xpose.msra.mxu0 0.0
  %831 = vmatpush.xpose.msra.mxu0 0.0
  %832 = vmatpush.xpose.msra.mxu0 0.0
  %833 = vmatpush.xpose.msra.mxu0 0.0
  %834 = vmatpush.xpose.msra.mxu0 0.0
  %835 = vmatpush.xpose.msra.mxu0 0.0
  %836 = vmatpush.xpose.msra.mxu0 0.0
  %837 = vmatpush.xpose.msra.mxu0 0.0
  %838 = vmatpush.xpose.msra.mxu0 %v821
  %839 = vmatmul.f32.gmra.mxu0 %v819
  %v840 = vpop.f32.mrf.mxu0
  %v841 = vadd.f32 0.0, %v840
  %842 = vdwg.mxu0
  %843 = vrot.lane.b32.xlu0 %v681, 112
  %v844 = vpop.permute.xlu0 %843
  %845 = vrot.lane.b32.xlu0 %v681, 80
  %v846 = vpop.permute.xlu0 %845
  %v847 = vsel %vm152, %v844, 0
  %v849 = vsel %vm152, %v846, 0
  %851 = vmatpush.xpose.msra.mxu0 0.0
  %852 = vmatpush.xpose.msra.mxu0 0.0
  %853 = vmatpush.xpose.msra.mxu0 0.0
  %854 = vmatpush.xpose.msra.mxu0 0.0
  %855 = vmatpush.xpose.msra.mxu0 0.0
  %856 = vmatpush.xpose.msra.mxu0 0.0
  %857 = vmatpush.xpose.msra.mxu0 0.0
  %858 = vmatpush.xpose.msra.mxu0 0.0
  %859 = vmatpush.xpose.msra.mxu0 0.0
  %860 = vmatpush.xpose.msra.mxu0 0.0
  %861 = vmatpush.xpose.msra.mxu0 0.0
  %862 = vmatpush.xpose.msra.mxu0 0.0
  %863 = vmatpush.xpose.msra.mxu0 0.0
  %864 = vmatpush.xpose.msra.mxu0 0.0
  %865 = vmatpush.xpose.msra.mxu0 0.0
  %866 = vmatpush.xpose.msra.mxu0 %v849
  %867 = vmatmul.f32.gmra.mxu0 %v847
  %v868 = vpop.f32.mrf.mxu0
  %v869 = vadd.f32 0.0, %v868
  %870 = vdwg.mxu0
  %v871 = vmul.f32 %v841, 0.25
  %v872 = vmul.f32 %v869, 0.25
  %v873 = vadd.f32 %v871, %v208
  %v874 = vadd.f32 %v872, %v209
  %v875 = vsel %vm214, %v873, -inf
  %876 = vmax.xlane.f32.xlu0 %v875
  %v877 = vpop.xlane.xlu0 %876
  %v878 = vsel %vm214, %v874, -inf
  %879 = vmax.xlane.f32.xlu0 %v878
  %v880 = vpop.xlane.xlu0 %879
  %v881 = vsub.f32 %v873, %v877
  %v882 = vsub.f32 %v874, %v880
  %v883 = vmul.f32 %v881, 1.442695
  %v884 = vpow.pop %v883
  %v885 = vmul.f32 %v882, 1.442695
  %v886 = vpow.pop %v885
  %v887 = vsel %vm214, %v884, 0.0
  %888 = vadd.xlane.f32.xlu0 %v887
  %v889 = vpop.xlane.xlu0 %888
  %v890 = vsel %vm214, %v886, 0.0
  %891 = vadd.xlane.f32.xlu0 %v890
  %v892 = vpop.xlane.xlu0 %891
  %v893 = vrcp.pop %v889
  %v894 = vrcp.pop %v892
  %v895 = vmul.f32 %v884, %v893
  %v896 = vmul.f32 %v886, %v894
  %897 = vrot.lane.b32.xlu0 %v678, 48
  %v898 = vpop.permute.xlu0 %897
  %v901 = vsel %vm214, %v895, 0
  %903 = vmatpush.msra.mxu0 0.0
  %904 = vmatpush.msra.mxu0 0.0
  %905 = vmatpush.msra.mxu0 0.0
  %906 = vmatpush.msra.mxu0 0.0
  %907 = vmatpush.msra.mxu0 0.0
  %908 = vmatpush.msra.mxu0 0.0
  %909 = vmatpush.msra.mxu0 0.0
  %910 = vmatpush.msra.mxu0 0.0
  %911 = vmatpush.msra.mxu0 0.0
  %912 = vmatpush.msra.mxu0 0.0
  %913 = vmatpush.msra.mxu0 0.0
  %914 = vmatpush.msra.mxu0 0.0
  %915 = vmatpush.msra.mxu0 0.0
  %916 = vmatpush.msra.mxu0 0.0
  %917 = vmatpush.msra.mxu0 0.0
  %918 = vmatpush.msra.mxu0 %v898
  %919 = vmatmul.f32.gmra.mxu0 %v901
  %v920 = vpop.f32.mrf.mxu0
  %v921 = vadd.f32 0.0, %v920
  %922 = vdwg.mxu0
  %923 = vrot.lane.b32.xlu0 %v681, 48
  %v924 = vpop.permute.xlu0 %923
  %v927 = vsel %vm214, %v896, 0
  %929 = vmatpush.msra.mxu0 0.0
  %930 = vmatpush.msra.mxu0 0.0
  %931 = vmatpush.msra.mxu0 0.0
  %932 = vmatpush.msra.mxu0 0.0
  %933 = vmatpush.msra.mxu0 0.0
  %934 = vmatpush.msra.mxu0 0.0
  %935 = vmatpush.msra.mxu0 0.0
  %936 = vmatpush.msra.mxu0 0.0
  %937 = vmatpush.msra.mxu0 0.0
  %938 = vmatpush.msra.mxu0 0.0
  %939 = vmatpush.msra.mxu0 0.0
  %940 = vmatpush.msra.mxu0 0.0
  %941 = vmatpush.msra.mxu0 0.0
  %942 = vmatpush.msra.mxu0 0.0
  %943 = vmatpush.msra.mxu0 0.0
  %944 = vmatpush.msra.mxu0 %v924
  %945 = vmatmul.f32.gmra.mxu0 %v927
  %v946 = vpop.f32.mrf.mxu0
  %v947 = vadd.f32 0.0, %v946
  %948 = vdwg.mxu0
  %951 = vrot.lane.b32.xlu0 %v921, 16
  %v952 = vpop.permute.xlu0 %951
  %953 = vrot.lane.b32.xlu0 %v947, 16
  %v954 = vpop.permute.xlu0 %953
  %v957 = vsel %vm152, %v787, %v952
  %v958 = vsel %vm152, %v813, %v954
  %v959 = vperm.slane %v650, 0
  %v961 = vsel %vm39, %v957, 0
  %v964 = vsel %vm39, %v958, 0
  %966 = vmatpush.msra.mxu0 0.0
  %967 = vmatpush.msra.mxu0 0.0
  %968 = vmatpush.msra.mxu0 0.0
  %969 = vmatpush.msra.mxu0 0.0
  %970 = vmatpush.msra.mxu0 0.0
  %971 = vmatpush.msra.mxu0 0.0
  %972 = vmatpush.msra.mxu0 0.0
  %973 = vmatpush.msra.mxu0 0.0
  %974 = vmatpush.msra.mxu0 0.0
  %975 = vmatpush.msra.mxu0 0.0
  %976 = vmatpush.msra.mxu0 0.0
  %977 = vmatpush.msra.mxu0 0.0
  %978 = vmatpush.msra.mxu0 %v640
  %979 = vmatpush.msra.mxu0 %v639
  %980 = vmatpush.msra.mxu0 %v638
  %981 = vmatpush.msra.mxu0 %v637
  %982 = vmatmul.f32.gmra.mxu0 %v961
  %v983 = vpop.f32.mrf.mxu0
  %v984 = vadd.f32 %v959, %v983
  %985 = vmatmul.f32.gmra.mxu0 %v964
  %v986 = vpop.f32.mrf.mxu0
  %v987 = vadd.f32 %v959, %v986
  %988 = vdwg.mxu0
  %v989 = vadd.f32 %v627, %v984
  %v990 = vadd.f32 %v628, %v987
  %v991 = vsel %vm39, %v989, 0.0
  %992 = vadd.xlane.f32.xlu0 %v991
  %v993 = vpop.xlane.xlu0 %992
  %v994 = vsel %vm39, %v990, 0.0
  %995 = vadd.xlane.f32.xlu0 %v994
  %v996 = vpop.xlane.xlu0 %995
  %v997 = vmul.f32 %v993, %v52
  %v998 = vmul.f32 %v996, %v52
  %v999 = vsub.f32 %v989, %v997
  %v1000 = vsub.f32 %v990, %v998
  %v1001 = vmul.f32 %v999, %v999
  %v1002 = vmul.f32 %v1000, %v1000
  %v1003 = vsel %vm39, %v1001, 0.0
  %1004 = vadd.xlane.f32.xlu0 %v1003
  %v1005 = vpop.xlane.xlu0 %1004
  %v1006 = vsel %vm39, %v1002, 0.0
  %1007 = vadd.xlane.f32.xlu0 %v1006
  %v1008 = vpop.xlane.xlu0 %1007
  %v1009 = vmul.f32 %v1005, %v52
  %v1010 = vmul.f32 %v1008, %v52
  %v1011 = vadd.f32 %v1009, 1e-05
  %v1012 = vadd.f32 %v1010, 1e-05
  %v1013 = vrsqrt.pop %v1011
  %v1014 = vmul.f32 %v1013, %v1011
  %v1015 = vmul.f32 %v1014, %v1013
  %v1016 = vmul.f32 0.5, %v1015
  %v1017 = vsub.f32 1.5, %v1016
  %v1018 = vmul.f32 %v1013, %v1017
  %vm1019 = vweird.f32 %v1011
  %vm1020 = vweird.f32 %v1013
  %vm1021 = vmor %vm1019, %vm1020
  %v1022 = vsel %vm1021, %v1013, %v1018
  %v1023 = vrsqrt.pop %v1012
  %v1024 = vmul.f32 %v1023, %v1012
  %v1025 = vmul.f32 %v1024, %v1023
  %v1026 = vmul.f32 0.5, %v1025
  %v1027 = vsub.f32 1.5, %v1026
  %v1028 = vmul.f32 %v1023, %v1027
  %vm1029 = vweird.f32 %v1012
  %vm1030 = vweird.f32 %v1023
  %vm1031 = vmor %vm1029, %vm1030
  %v1032 = vsel %vm1031, %v1023, %v1028
  %v1033 = vmul.f32 %v999, %v1022
  %v1034 = vmul.f32 %v1000, %v1032
  %v1035 = vperm.slane %v650, 3
  %v1036 = vmul.f32 %v1035, %v1033
  %v1037 = vmul.f32 %v1035, %v1034
  %v1038 = vperm.slane %v650, 4
  %v1039 = vadd.f32 %v1036, %v1038
  %v1040 = vadd.f32 %v1037, %v1038
  %v1041 = vperm.slane %v650, 1
  %v1043 = vsel %vm39, %v1039, 0
  %v1046 = vsel %vm39, %v1040, 0
  %1048 = vmatpush.msra.mxu0 0.0
  %1049 = vmatpush.msra.mxu0 0.0
  %1050 = vmatpush.msra.mxu0 0.0
  %1051 = vmatpush.msra.mxu0 0.0
  %1052 = vmatpush.msra.mxu0 0.0
  %1053 = vmatpush.msra.mxu0 0.0
  %1054 = vmatpush.msra.mxu0 0.0
  %1055 = vmatpush.msra.mxu0 0.0
  %1056 = vmatpush.msra.mxu0 0.0
  %1057 = vmatpush.msra.mxu0 0.0
  %1058 = vmatpush.msra.mxu0 0.0
  %1059 = vmatpush.msra.mxu0 0.0
  %1060 = vmatpush.msra.mxu0 %v644
  %1061 = vmatpush.msra.mxu0 %v643
  %1062 = vmatpush.msra.mxu0 %v642
  %1063 = vmatpush.msra.mxu0 %v641
  %1064 = vmatmul.f32.gmra.mxu0 %v1043
  %v1065 = vpop.f32.mrf.mxu0
  %v1066 = vadd.f32 %v1041, %v1065
  %1067 = vmatmul.f32.gmra.mxu0 %v1046
  %v1068 = vpop.f32.mrf.mxu0
  %v1069 = vadd.f32 %v1041, %v1068
  %1070 = vdwg.mxu0
  %v1071 = vmax.f32 %v1066, 0.0
  %v1072 = vmax.f32 %v1069, 0.0
  %v1073 = vperm.slane %v650, 2
  %v1075 = vsel %vm39, %v1071, 0
  %v1078 = vsel %vm39, %v1072, 0
  %1080 = vmatpush.msra.mxu0 0.0
  %1081 = vmatpush.msra.mxu0 0.0
  %1082 = vmatpush.msra.mxu0 0.0
  %1083 = vmatpush.msra.mxu0 0.0
  %1084 = vmatpush.msra.mxu0 0.0
  %1085 = vmatpush.msra.mxu0 0.0
  %1086 = vmatpush.msra.mxu0 0.0
  %1087 = vmatpush.msra.mxu0 0.0
  %1088 = vmatpush.msra.mxu0 0.0
  %1089 = vmatpush.msra.mxu0 0.0
  %1090 = vmatpush.msra.mxu0 0.0
  %1091 = vmatpush.msra.mxu0 0.0
  %1092 = vmatpush.msra.mxu0 %v648
  %1093 = vmatpush.msra.mxu0 %v647
  %1094 = vmatpush.msra.mxu0 %v646
  %1095 = vmatpush.msra.mxu0 %v645
  %1096 = vmatmul.f32.gmra.mxu0 %v1075
  %v1097 = vpop.f32.mrf.mxu0
  %v1098 = vadd.f32 %v1073, %v1097
  %1099 = vmatmul.f32.gmra.mxu0 %v1078
  %v1100 = vpop.f32.mrf.mxu0
  %v1101 = vadd.f32 %v1073, %v1100
  %1102 = vdwg.mxu0
  %v1103 = vadd.f32 %v1039, %v1098
  %v1104 = vadd.f32 %v1040, %v1101
  %v1105 = vsel %vm39, %v1103, 0.0
  %1106 = vadd.xlane.f32.xlu0 %v1105
  %v1107 = vpop.xlane.xlu0 %1106
  %v1108 = vsel %vm39, %v1104, 0.0
  %1109 = vadd.xlane.f32.xlu0 %v1108
  %v1110 = vpop.xlane.xlu0 %1109
  %v1111 = vmul.f32 %v1107, %v52
  %v1112 = vmul.f32 %v1110, %v52
  %v1113 = vsub.f32 %v1103, %v1111
  %v1114 = vsub.f32 %v1104, %v1112
  %v1115 = vmul.f32 %v1113, %v1113
  %v1116 = vmul.f32 %v1114, %v1114
  %v1117 = vsel %vm39, %v1115, 0.0
  %1118 = vadd.xlane.f32.xlu0 %v1117
  %v1119 = vpop.xlane.xlu0 %1118
  %v1120 = vsel %vm39, %v1116, 0.0
  %1121 = vadd.xlane.f32.xlu0 %v1120
  %v1122 = vpop.xlane.xlu0 %1121
  %v1123 = vmul.f32 %v1119, %v52
  %v1124 = vmul.f32 %v1122, %v52
  %v1125 = vadd.f32 %v1123, 1e-05
  %v1126 = vadd.f32 %v1124, 1e-05
  %v1127 = vrsqrt.pop %v1125
  %v1128 = vmul.f32 %v1127, %v1125
  %v1129 = vmul.f32 %v1128, %v1127
  %v1130 = vmul.f32 0.5, %v1129
  %v1131 = vsub.f32 1.5, %v1130
  %v1132 = vmul.f32 %v1127, %v1131
  %vm1133 = vweird.f32 %v1125
  %vm1134 = vweird.f32 %v1127
  %vm1135 = vmor %vm1133, %vm1134
  %v1136 = vsel %vm1135, %v1127, %v1132
  %v1137 = vrsqrt.pop %v1126
  %v1138 = vmul.f32 %v1137, %v1126
  %v1139 = vmul.f32 %v1138, %v1137
  %v1140 = vmul.f32 0.5, %v1139
  %v1141 = vsub.f32 1.5, %v1140
  %v1142 = vmul.f32 %v1137, %v1141
  %vm1143 = vweird.f32 %v1126
  %vm1144 = vweird.f32 %v1137
  %vm1145 = vmor %vm1143, %vm1144
  %v1146 = vsel %vm1145, %v1137, %v1142
  %v1147 = vmul.f32 %v1113, %v1136
  %v1148 = vmul.f32 %v1114, %v1146
  %v1149 = vperm.slane %v650, 5
  %v1150 = vmul.f32 %v1149, %v1147
  %v1151 = vmul.f32 %v1149, %v1148
  %v1152 = vperm.slane %v650, 6
  %v1153 = vadd.f32 %v1150, %v1152
  %v1154 = vadd.f32 %v1151, %v1152
  %v1155 = vld [vmem:[%s2 + $0x2] sm:$0x1]
  %v1156 = vld [vmem:[%s2 + $0x3] sm:$0x1]
  %v1157 = vsel %vm39, %v1153, 0.0
  %1158 = vadd.xlane.f32.xlu0 %v1157
  %v1159 = vpop.xlane.xlu0 %1158
  %v1160 = vsel %vm39, %v1154, 0.0
  %1161 = vadd.xlane.f32.xlu0 %v1160
  %v1162 = vpop.xlane.xlu0 %1161
  %v1163 = vmul.f32 %v1159, %v52
  %v1164 = vmul.f32 %v1162, %v52
  %v1165 = vsub.f32 %v1153, %v1163
  %v1166 = vsub.f32 %v1154, %v1164
  %v1167 = vmul.f32 %v1165, %v1165
  %v1168 = vmul.f32 %v1166, %v1166
  %v1169 = vsel %vm39, %v1167, 0.0
  %1170 = vadd.xlane.f32.xlu0 %v1169
  %v1171 = vpop.xlane.xlu0 %1170
  %v1172 = vsel %vm39, %v1168, 0.0
  %1173 = vadd.xlane.f32.xlu0 %v1172
  %v1174 = vpop.xlane.xlu0 %1173
  %v1175 = vmul.f32 %v1171, %v52
  %v1176 = vmul.f32 %v1174, %v52
  %v1177 = vadd.f32 %v1175, 1e-05
  %v1178 = vadd.f32 %v1176, 1e-05
  %v1179 = vrsqrt.pop %v1177
  %v1180 = vmul.f32 %v1179, %v1177
  %v1181 = vmul.f32 %v1180, %v1179
  %v1182 = vmul.f32 0.5, %v1181
  %v1183 = vsub.f32 1.5, %v1182
  %v1184 = vmul.f32 %v1179, %v1183
  %vm1185 = vweird.f32 %v1177
  %vm1186 = vweird.f32 %v1179
  %vm1187 = vmor %vm1185, %vm1186
  %v1188 = vsel %vm1187, %v1179, %v1184
  %v1189 = vrsqrt.pop %v1178
  %v1190 = vmul.f32 %v1189, %v1178
  %v1191 = vmul.f32 %v1190, %v1189
  %v1192 = vmul.f32 0.5, %v1191
  %v1193 = vsub.f32 1.5, %v1192
  %v1194 = vmul.f32 %v1189, %v1193
  %vm1195 = vweird.f32 %v1178
  %vm1196 = vweird.f32 %v1189
  %vm1197 = vmor %vm1195, %vm1196
  %v1198 = vsel %vm1197, %v1189, %v1194
  %v1199 = vmul.f32 %v1165, %v1188
  %v1200 = vmul.f32 %v1166, %v1198
  %v1201 = vperm.slane %v1155, 0
  %v1202 = vmul.f32 %v1201, %v1199
  %v1203 = vmul.f32 %v1201, %v1200
  %v1204 = vperm.slane %v1156, 0
  %v1205 = vadd.f32 %v1202, %v1204
  %v1206 = vadd.f32 %v1203, %v1204
  %v1208 = vrot.slane %v1205, 7
  %v1211 = vrot.slane %v1206, 6
  %vm1213 = vcmask 1040384
  %v1214 = vsel %vm1213, %v1208, %v1211
  %v1215 = vld [vmem:[%s7] sm:$0xff]
  %v1216 = vld [vmem:[%s7 + $0x8] sm:$0xff]
  %v1217 = vld [vmem:[%s8] sm:$0xff]
  %v1218 = vld [vmem:[%s8 + $0x8] sm:$0xff]
  %v1219 = vld [vmem:[%s8 + $0x10] sm:$0xff]
  %v1220 = vld [vmem:[%s8 + $0x18] sm:$0xff]
  %s1221 = scalar_lea.vmem %s8, 32
  %v1222 = vld [vmem:[%s1221] sm:$0xff]
  %v1223 = vld [vmem:[%s1221 + $0x8] sm:$0xff]
  %v1224 = vld [vmem:[%s1221 + $0x10] sm:$0xff]
  %v1225 = vld [vmem:[%s1221 + $0x18] sm:$0xff]
  %v1226 = vld [vmem:[%s9] sm:$0x3]
  %v1228 = vsel %vm39, %v1215, 0
  %v1231 = vsel %vm39, %v1216, 0
  %1233 = vmatpush.msra.mxu0 0.0
  %1234 = vmatpush.msra.mxu0 0.0
  %1235 = vmatpush.msra.mxu0 0.0
  %1236 = vmatpush.msra.mxu0 0.0
  %1237 = vmatpush.msra.mxu0 0.0
  %1238 = vmatpush.msra.mxu0 0.0
  %1239 = vmatpush.msra.mxu0 0.0
  %1240 = vmatpush.msra.mxu0 0.0
  %1241 = vmatpush.msra.mxu0 0.0
  %1242 = vmatpush.msra.mxu0 0.0
  %1243 = vmatpush.msra.mxu0 0.0
  %1244 = vmatpush.msra.mxu0 0.0
  %1245 = vmatpush.msra.mxu0 %v1220
  %1246 = vmatpush.msra.mxu0 %v1219
  %1247 = vmatpush.msra.mxu0 %v1218
  %1248 = vmatpush.msra.mxu0 %v1217
  %1249 = vmatmul.f32.gmra.mxu0 %v1228
  %v1250 = vpop.f32.mrf.mxu0
  %v1251 = vadd.f32 0.0, %v1250
  %1252 = vmatmul.f32.gmra.mxu0 %v1231
  %v1253 = vpop.f32.mrf.mxu0
  %v1254 = vadd.f32 0.0, %v1253
  %1255 = vdwg.mxu0
  %v1257 = vsel %vm39, 0.0, 0
  %1259 = vmatpush.msra.mxu0 0.0
  %1260 = vmatpush.msra.mxu0 0.0
  %1261 = vmatpush.msra.mxu0 0.0
  %1262 = vmatpush.msra.mxu0 0.0
  %1263 = vmatpush.msra.mxu0 0.0
  %1264 = vmatpush.msra.mxu0 0.0
  %1265 = vmatpush.msra.mxu0 0.0
  %1266 = vmatpush.msra.mxu0 0.0
  %1267 = vmatpush.msra.mxu0 0.0
  %1268 = vmatpush.msra.mxu0 0.0
  %1269 = vmatpush.msra.mxu0 0.0
  %1270 = vmatpush.msra.mxu0 0.0
  %1271 = vmatpush.msra.mxu0 %v1225
  %1272 = vmatpush.msra.mxu0 %v1224
  %1273 = vmatpush.msra.mxu0 %v1223
  %1274 = vmatpush.msra.mxu0 %v1222
  %1275 = vmatmul.f32.gmra.mxu0 %v1257
  %v1276 = vpop.f32.mrf.mxu0
  %v1277 = vadd.f32 0.0, %v1276
  %1278 = vdwg.mxu0
  %v1279 = vadd.f32 %v1251, %v1277
  %v1280 = vxor.u32 %v1279, 2147483648
  %v1281 = vmul.f32 %v1280, 1.442695
  %v1282 = vpow.pop %v1281
  %v1283 = vadd.f32 %v1282, 1.0
  %v1284 = vrcp.pop %v1283
  %v1285 = vmul.f32 %v1283, %v1284
  %v1286 = vsub.f32 1.0, %v1285
  %v1287 = vmul.f32 %v1284, %v1286
  %v1288 = vadd.f32 %v1284, %v1287
  %vm1289 = vweird.f32 %v1283
  %vm1290 = vweird.f32 %v1284
  %vm1291 = vmor %vm1289, %vm1290
  %v1292 = vsel %vm1291, %v1284, %v1288
  %v1293 = vand.u32 2147483647, %v1283
  %vm1294 = vcmp.eq.f32.partialorder %v1293, 8.507059e+37
  %v1295 = vand.u32 %v1283, 2147483648
  %v1296 = vor.u32 1.1754944e-38, %v1295
  %v1297 = vsel %vm1294, %v1296, %v1292
  %v1298 = vmul.f32 1.0, %v1297
  %1300 = vrot.lane.b32.xlu0 %v1277, 64
  %v1301 = vpop.permute.xlu0 %1300
  %v1303 = vmul.f32 %v1298, %v1301
  %1305 = vrot.lane.b32.xlu0 %v1303, 64
  %v1306 = vpop.permute.xlu0 %1305
  %v1308 = vadd.f32 %v1251, %v1306
  %v1309 = vtanh.pop %v1308
  %v1310 = vsub.f32 1.0, %v1298
  %1312 = vrot.lane.b32.xlu0 %v1309, 96
  %v1313 = vpop.permute.xlu0 %1312
  %v1315 = vmul.f32 %v1310, %v1313
  %v1316 = vmul.f32 %v1298, 0.0
  %v1317 = vadd.f32 %v1315, %v1316
  %vm1318 = vcmp.gt.s32.totalorder %v1226, 0
  %v1319 = vsel %vm1318, 1, 0
  %1320 = vset.pattern.permute.xlu0 0
  %1321 = vperm.xlu0 %1320, %v1319
  %v1322 = vpop.permute.xlu0 %1321
  %vm1323 = vcmp.eq.s32.totalorder %v1322, 1
  %v1324 = vsel %vm1323, %v1317, 0.0
  %1326 = vrot.lane.b32.xlu0 %v1324, 96
  %v1327 = vpop.permute.xlu0 %1326
  %v1328 = vsel %vm39, %v1327, 0
  %1330 = vmatpush.msra.mxu0 0.0
  %1331 = vmatpush.msra.mxu0 0.0
  %1332 = vmatpush.msra.mxu0 0.0
  %1333 = vmatpush.msra.mxu0 0.0
  %1334 = vmatpush.msra.mxu0 0.0
  %1335 = vmatpush.msra.mxu0 0.0
  %1336 = vmatpush.msra.mxu0 0.0
  %1337 = vmatpush.msra.mxu0 0.0
  %1338 = vmatpush.msra.mxu0 0.0
  %1339 = vmatpush.msra.mxu0 0.0
  %1340 = vmatpush.msra.mxu0 0.0
  %1341 = vmatpush.msra.mxu0 0.0
  %1342 = vmatpush.msra.mxu0 %v1225
  %1343 = vmatpush.msra.mxu0 %v1224
  %1344 = vmatpush.msra.mxu0 %v1223
  %1345 = vmatpush.msra.mxu0 %v1222
  %1346 = vmatmul.f32.gmra.mxu0 %v1328
  %v1347 = vpop.f32.mrf.mxu0
  %v1348 = vadd.f32 0.0, %v1347
  %1349 = vdwg.mxu0
  %v1351 = vrot.slane %v1348, 6
  %v1353 = vadd.f32 %v1251, %v1351
  %v1354 = vxor.u32 %v1353, 2147483648
  %v1355 = vmul.f32 %v1354, 1.442695
  %v1356 = vpow.pop %v1355
  %v1357 = vadd.f32 %v1356, 1.0
  %v1358 = vrcp.pop %v1357
  %v1359 = vmul.f32 %v1357, %v1358
  %v1360 = vsub.f32 1.0, %v1359
  %v1361 = vmul.f32 %v1358, %v1360
  %v1362 = vadd.f32 %v1358, %v1361
  %vm1363 = vweird.f32 %v1357
  %vm1364 = vweird.f32 %v1358
  %vm1365 = vmor %vm1363, %vm1364
  %v1366 = vsel %vm1365, %v1358, %v1362
  %v1367 = vand.u32 2147483647, %v1357
  %vm1368 = vcmp.eq.f32.partialorder %v1367, 8.507059e+37
  %v1369 = vand.u32 %v1357, 2147483648
  %v1370 = vor.u32 1.1754944e-38, %v1369
  %v1371 = vsel %vm1368, %v1370, %v1366
  %v1372 = vmul.f32 1.0, %v1371
  %1373 = vrot.lane.b32.xlu0 %v1351, 64
  %v1374 = vpop.permute.xlu0 %1373
  %v1376 = vmul.f32 %v1372, %v1374
  %1378 = vrot.lane.b32.xlu0 %v1376, 64
  %v1379 = vpop.permute.xlu0 %1378
  %v1381 = vadd.f32 %v1251, %v1379
  %v1382 = vtanh.pop %v1381
  %v1383 = vsub.f32 1.0, %v1372
  %1385 = vrot.lane.b32.xlu0 %v1382, 96
  %v1386 = vpop.permute.xlu0 %1385
  %v1388 = vmul.f32 %v1383, %v1386
  %v1389 = vrot.slane %v1324, 6
  %v1391 = vmul.f32 %v1372, %v1389
  %v1392 = vadd.f32 %v1388, %v1391
  %vm1393 = vcmp.gt.s32.totalorder %v1226, 1
  %v1394 = vsel %vm1393, 1, 0
  %1395 = vset.pattern.permute.xlu0 0
  %1396 = vperm.xlu0 %1395, %v1394
  %v1397 = vpop.permute.xlu0 %1396
  %vm1398 = vcmp.eq.s32.totalorder %v1397, 1
  %v1400 = vrot.slane %v1392, 2
  %1401 = vrot.lane.b32.xlu0 %v1400, 96
  %v1402 = vpop.permute.xlu0 %1401
  %v1405 = vsel %vm1398, %v1402, %v1327
  %v1407 = vsel %vm39, %v1405, 0
  %1409 = vmatpush.msra.mxu0 0.0
  %1410 = vmatpush.msra.mxu0 0.0
  %1411 = vmatpush.msra.mxu0 0.0
  %1412 = vmatpush.msra.mxu0 0.0
  %1413 = vmatpush.msra.mxu0 0.0
  %1414 = vmatpush.msra.mxu0 0.0
  %1415 = vmatpush.msra.mxu0 0.0
  %1416 = vmatpush.msra.mxu0 0.0
  %1417 = vmatpush.msra.mxu0 0.0
  %1418 = vmatpush.msra.mxu0 0.0
  %1419 = vmatpush.msra.mxu0 0.0
  %1420 = vmatpush.msra.mxu0 0.0
  %1421 = vmatpush.msra.mxu0 %v1225
  %1422 = vmatpush.msra.mxu0 %v1224
  %1423 = vmatpush.msra.mxu0 %v1223
  %1424 = vmatpush.msra.mxu0 %v1222
  %1425 = vmatmul.f32.gmra.mxu0 %v1407
  %v1426 = vpop.f32.mrf.mxu0
  %v1427 = vadd.f32 0.0, %v1426
  %1428 = vdwg.mxu0
  %v1430 = vrot.slane %v1427, 4
  %v1432 = vadd.f32 %v1251, %v1430
  %v1433 = vxor.u32 %v1432, 2147483648
  %v1434 = vmul.f32 %v1433, 1.442695
  %v1435 = vpow.pop %v1434
  %v1436 = vadd.f32 %v1435, 1.0
  %v1437 = vrcp.pop %v1436
  %v1438 = vmul.f32 %v1436, %v1437
  %v1439 = vsub.f32 1.0, %v1438
  %v1440 = vmul.f32 %v1437, %v1439
  %v1441 = vadd.f32 %v1437, %v1440
  %vm1442 = vweird.f32 %v1436
  %vm1443 = vweird.f32 %v1437
  %vm1444 = vmor %vm1442, %vm1443
  %v1445 = vsel %vm1444, %v1437, %v1441
  %v1446 = vand.u32 2147483647, %v1436
  %vm1447 = vcmp.eq.f32.partialorder %v1446, 8.507059e+37
  %v1448 = vand.u32 %v1436, 2147483648
  %v1449 = vor.u32 1.1754944e-38, %v1448
  %v1450 = vsel %vm1447, %v1449, %v1445
  %v1451 = vmul.f32 1.0, %v1450
  %1452 = vrot.lane.b32.xlu0 %v1430, 64
  %v1453 = vpop.permute.xlu0 %1452
  %v1455 = vmul.f32 %v1451, %v1453
  %1457 = vrot.lane.b32.xlu0 %v1455, 64
  %v1458 = vpop.permute.xlu0 %1457
  %v1460 = vadd.f32 %v1251, %v1458
  %v1461 = vtanh.pop %v1460
  %v1462 = vsub.f32 1.0, %v1451
  %1464 = vrot.lane.b32.xlu0 %v1461, 96
  %v1465 = vpop.permute.xlu0 %1464
  %v1467 = vmul.f32 %v1462, %v1465
  %v1468 = vrot.slane %v1405, 4
  %1469 = vrot.lane.b32.xlu0 %v1468, 32
  %v1470 = vpop.permute.xlu0 %1469
  %v1472 = vmul.f32 %v1451, %v1470
  %v1473 = vadd.f32 %v1467, %v1472
  %vm1474 = vcmp.gt.s32.totalorder %v1226, 2
  %v1475 = vsel %vm1474, 1, 0
  %1476 = vset.pattern.permute.xlu0 0
  %1477 = vperm.xlu0 %1476, %v1475
  %v1478 = vpop.permute.xlu0 %1477
  %vm1479 = vcmp.eq.s32.totalorder %v1478, 1
  %v1481 = vrot.slane %v1473, 4
  %1482 = vrot.lane.b32.xlu0 %v1481, 96
  %v1483 = vpop.permute.xlu0 %1482
  %v1485 = vsel %vm1479, %v1483, %v1405
  %v1487 = vsel %vm39, %v1485, 0
  %1489 = vmatpush.msra.mxu0 0.0
  %1490 = vmatpush.msra.mxu0 0.0
  %1491 = vmatpush.msra.mxu0 0.0
  %1492 = vmatpush.msra.mxu0 0.0
  %1493 = vmatpush.msra.mxu0 0.0
  %1494 = vmatpush.msra.mxu0 0.0
  %1495 = vmatpush.msra.mxu0 0.0
  %1496 = vmatpush.msra.mxu0 0.0
  %1497 = vmatpush.msra.mxu0 0.0
  %1498 = vmatpush.msra.mxu0 0.0
  %1499 = vmatpush.msra.mxu0 0.0
  %1500 = vmatpush.msra.mxu0 0.0
  %1501 = vmatpush.msra.mxu0 %v1225
  %1502 = vmatpush.msra.mxu0 %v1224
  %1503 = vmatpush.msra.mxu0 %v1223
  %1504 = vmatpush.msra.mxu0 %v1222
  %1505 = vmatmul.f32.gmra.mxu0 %v1487
  %v1506 = vpop.f32.mrf.mxu0
  %v1507 = vadd.f32 0.0, %v1506
  %1508 = vdwg.mxu0
  %v1510 = vrot.slane %v1507, 2
  %v1512 = vadd.f32 %v1251, %v1510
  %v1513 = vxor.u32 %v1512, 2147483648
  %v1514 = vmul.f32 %v1513, 1.442695
  %v1515 = vpow.pop %v1514
  %v1516 = vadd.f32 %v1515, 1.0
  %v1517 = vrcp.pop %v1516
  %v1518 = vmul.f32 %v1516, %v1517
  %v1519 = vsub.f32 1.0, %v1518
  %v1520 = vmul.f32 %v1517, %v1519
  %v1521 = vadd.f32 %v1517, %v1520
  %vm1522 = vweird.f32 %v1516
  %vm1523 = vweird.f32 %v1517
  %vm1524 = vmor %vm1522, %vm1523
  %v1525 = vsel %vm1524, %v1517, %v1521
  %v1526 = vand.u32 2147483647, %v1516
  %vm1527 = vcmp.eq.f32.partialorder %v1526, 8.507059e+37
  %v1528 = vand.u32 %v1516, 2147483648
  %v1529 = vor.u32 1.1754944e-38, %v1528
  %v1530 = vsel %vm1527, %v1529, %v1525
  %v1531 = vmul.f32 1.0, %v1530
  %1532 = vrot.lane.b32.xlu0 %v1510, 64
  %v1533 = vpop.permute.xlu0 %1532
  %v1535 = vmul.f32 %v1531, %v1533
  %1537 = vrot.lane.b32.xlu0 %v1535, 64
  %v1538 = vpop.permute.xlu0 %1537
  %v1540 = vadd.f32 %v1251, %v1538
  %v1541 = vtanh.pop %v1540
  %v1542 = vsub.f32 1.0, %v1531
  %1544 = vrot.lane.b32.xlu0 %v1541, 96
  %v1545 = vpop.permute.xlu0 %1544
  %v1547 = vmul.f32 %v1542, %v1545
  %v1548 = vrot.slane %v1485, 2
  %1549 = vrot.lane.b32.xlu0 %v1548, 32
  %v1550 = vpop.permute.xlu0 %1549
  %v1552 = vmul.f32 %v1531, %v1550
  %v1553 = vadd.f32 %v1547, %v1552
  %vm1554 = vcmp.gt.s32.totalorder %v1226, 3
  %v1555 = vsel %vm1554, 1, 0
  %1556 = vset.pattern.permute.xlu0 0
  %1557 = vperm.xlu0 %1556, %v1555
  %v1558 = vpop.permute.xlu0 %1557
  %vm1559 = vcmp.eq.s32.totalorder %v1558, 1
  %v1561 = vrot.slane %v1553, 6
  %1562 = vrot.lane.b32.xlu0 %v1561, 96
  %v1563 = vpop.permute.xlu0 %1562
  %v1565 = vsel %vm1559, %v1563, %v1485
  %v1567 = vsel %vm39, %v1565, 0
  %1569 = vmatpush.msra.mxu0 0.0
  %1570 = vmatpush.msra.mxu0 0.0
  %1571 = vmatpush.msra.mxu0 0.0
  %1572 = vmatpush.msra.mxu0 0.0
  %1573 = vmatpush.msra.mxu0 0.0
  %1574 = vmatpush.msra.mxu0 0.0
  %1575 = vmatpush.msra.mxu0 0.0
  %1576 = vmatpush.msra.mxu0 0.0
  %1577 = vmatpush.msra.mxu0 0.0
  %1578 = vmatpush.msra.mxu0 0.0
  %1579 = vmatpush.msra.mxu0 0.0
  %1580 = vmatpush.msra.mxu0 0.0
  %1581 = vmatpush.msra.mxu0 %v1225
  %1582 = vmatpush.msra.mxu0 %v1224
  %1583 = vmatpush.msra.mxu0 %v1223
  %1584 = vmatpush.msra.mxu0 %v1222
  %1585 = vmatmul.f32.gmra.mxu0 %v1567
  %v1586 = vpop.f32.mrf.mxu0
  %v1587 = vadd.f32 0.0, %v1586
  %1588 = vdwg.mxu0
  %v1589 = vadd.f32 %v1254, %v1587
  %v1590 = vxor.u32 %v1589, 2147483648
  %v1591 = vmul.f32 %v1590, 1.442695
  %v1592 = vpow.pop %v1591
  %v1593 = vadd.f32 %v1592, 1.0
  %v1594 = vrcp.pop %v1593
  %v1595 = vmul.f32 %v1593, %v1594
  %v1596 = vsub.f32 1.0, %v1595
  %v1597 = vmul.f32 %v1594, %v1596
  %v1598 = vadd.f32 %v1594, %v1597
  %vm1599 = vweird.f32 %v1593
  %vm1600 = vweird.f32 %v1594
  %vm1601 = vmor %vm1599, %vm1600
  %v1602 = vsel %vm1601, %v1594, %v1598
  %v1603 = vand.u32 2147483647, %v1593
  %vm1604 = vcmp.eq.f32.partialorder %v1603, 8.507059e+37
  %v1605 = vand.u32 %v1593, 2147483648
  %v1606 = vor.u32 1.1754944e-38, %v1605
  %v1607 = vsel %vm1604, %v1606, %v1602
  %v1608 = vmul.f32 1.0, %v1607
  %1610 = vrot.lane.b32.xlu0 %v1587, 64
  %v1611 = vpop.permute.xlu0 %1610
  %v1613 = vmul.f32 %v1608, %v1611
  %1615 = vrot.lane.b32.xlu0 %v1613, 64
  %v1616 = vpop.permute.xlu0 %1615
  %v1618 = vadd.f32 %v1254, %v1616
  %v1619 = vtanh.pop %v1618
  %v1620 = vsub.f32 1.0, %v1608
  %1622 = vrot.lane.b32.xlu0 %v1619, 96
  %v1623 = vpop.permute.xlu0 %1622
  %v1625 = vmul.f32 %v1620, %v1623
  %1626 = vrot.lane.b32.xlu0 %v1565, 32
  %v1627 = vpop.permute.xlu0 %1626
  %v1629 = vmul.f32 %v1608, %v1627
  %v1630 = vadd.f32 %v1625, %v1629
  %vm1631 = vcmp.gt.s32.totalorder %v1226, 4
  %v1632 = vsel %vm1631, 1, 0
  %1633 = vset.pattern.permute.xlu0 0
  %1634 = vperm.xlu0 %1633, %v1632
  %v1635 = vpop.permute.xlu0 %1634
  %vm1636 = vcmp.eq.s32.totalorder %v1635, 1
  %v1637 = vsel %vm1636, %v1630, %v1627
  %1639 = vrot.lane.b32.xlu0 %v1637, 96
  %v1640 = vpop.permute.xlu0 %1639
  %v1641 = vsel %vm39, %v1640, 0
  %1643 = vmatpush.msra.mxu0 0.0
  %1644 = vmatpush.msra.mxu0 0.0
  %1645 = vmatpush.msra.mxu0 0.0
  %1646 = vmatpush.msra.mxu0 0.0
  %1647 = vmatpush.msra.mxu0 0.0
  %1648 = vmatpush.msra.mxu0 0.0
  %1649 = vmatpush.msra.mxu0 0.0
  %1650 = vmatpush.msra.mxu0 0.0
  %1651 = vmatpush.msra.mxu0 0.0
  %1652 = vmatpush.msra.mxu0 0.0
  %1653 = vmatpush.msra.mxu0 0.0
  %1654 = vmatpush.msra.mxu0 0.0
  %1655 = vmatpush.msra.mxu0 %v1225
  %1656 = vmatpush.msra.mxu0 %v1224
  %1657 = vmatpush.msra.mxu0 %v1223
  %1658 = vmatpush.msra.mxu0 %v1222
  %1659 = vmatmul.f32.gmra.mxu0 %v1641
  %v1660 = vpop.f32.mrf.mxu0
  %v1661 = vadd.f32 0.0, %v1660
  %1662 = vdwg.mxu0
  %v1664 = vrot.slane %v1661, 6
  %v1666 = vadd.f32 %v1254, %v1664
  %v1667 = vxor.u32 %v1666, 2147483648
  %v1668 = vmul.f32 %v1667, 1.442695
  %v1669 = vpow.pop %v1668
  %v1670 = vadd.f32 %v1669, 1.0
  %v1671 = vrcp.pop %v1670
  %v1672 = vmul.f32 %v1670, %v1671
  %v1673 = vsub.f32 1.0, %v1672
  %v1674 = vmul.f32 %v1671, %v1673
  %v1675 = vadd.f32 %v1671, %v1674
  %vm1676 = vweird.f32 %v1670
  %vm1677 = vweird.f32 %v1671
  %vm1678 = vmor %vm1676, %vm1677
  %v1679 = vsel %vm1678, %v1671, %v1675
  %v1680 = vand.u32 2147483647, %v1670
  %vm1681 = vcmp.eq.f32.partialorder %v1680, 8.507059e+37
  %v1682 = vand.u32 %v1670, 2147483648
  %v1683 = vor.u32 1.1754944e-38, %v1682
  %v1684 = vsel %vm1681, %v1683, %v1679
  %v1685 = vmul.f32 1.0, %v1684
  %1686 = vrot.lane.b32.xlu0 %v1664, 64
  %v1687 = vpop.permute.xlu0 %1686
  %v1689 = vmul.f32 %v1685, %v1687
  %1691 = vrot.lane.b32.xlu0 %v1689, 64
  %v1692 = vpop.permute.xlu0 %1691
  %v1694 = vadd.f32 %v1254, %v1692
  %v1695 = vtanh.pop %v1694
  %v1696 = vsub.f32 1.0, %v1685
  %1698 = vrot.lane.b32.xlu0 %v1695, 96
  %v1699 = vpop.permute.xlu0 %1698
  %v1701 = vmul.f32 %v1696, %v1699
  %v1702 = vrot.slane %v1637, 6
  %v1704 = vmul.f32 %v1685, %v1702
  %v1705 = vadd.f32 %v1701, %v1704
  %vm1706 = vcmp.gt.s32.totalorder %v1226, 5
  %v1707 = vsel %vm1706, 1, 0
  %1708 = vset.pattern.permute.xlu0 0
  %1709 = vperm.xlu0 %1708, %v1707
  %v1710 = vpop.permute.xlu0 %1709
  %vm1711 = vcmp.eq.s32.totalorder %v1710, 1
  %v1713 = vrot.slane %v1705, 2
  %1714 = vrot.lane.b32.xlu0 %v1713, 96
  %v1715 = vpop.permute.xlu0 %1714
  %v1718 = vsel %vm1711, %v1715, %v1640
  %v1720 = vsel %vm39, %v1718, 0
  %1722 = vmatpush.msra.mxu0 0.0
  %1723 = vmatpush.msra.mxu0 0.0
  %1724 = vmatpush.msra.mxu0 0.0
  %1725 = vmatpush.msra.mxu0 0.0
  %1726 = vmatpush.msra.mxu0 0.0
  %1727 = vmatpush.msra.mxu0 0.0
  %1728 = vmatpush.msra.mxu0 0.0
  %1729 = vmatpush.msra.mxu0 0.0
  %1730 = vmatpush.msra.mxu0 0.0
  %1731 = vmatpush.msra.mxu0 0.0
  %1732 = vmatpush.msra.mxu0 0.0
  %1733 = vmatpush.msra.mxu0 0.0
  %1734 = vmatpush.msra.mxu0 %v1225
  %1735 = vmatpush.msra.mxu0 %v1224
  %1736 = vmatpush.msra.mxu0 %v1223
  %1737 = vmatpush.msra.mxu0 %v1222
  %1738 = vmatmul.f32.gmra.mxu0 %v1720
  %v1739 = vpop.f32.mrf.mxu0
  %v1740 = vadd.f32 0.0, %v1739
  %1741 = vdwg.mxu0
  %v1743 = vrot.slane %v1740, 4
  %v1745 = vadd.f32 %v1254, %v1743
  %v1746 = vxor.u32 %v1745, 2147483648
  %v1747 = vmul.f32 %v1746, 1.442695
  %v1748 = vpow.pop %v1747
  %v1749 = vadd.f32 %v1748, 1.0
  %v1750 = vrcp.pop %v1749
  %v1751 = vmul.f32 %v1749, %v1750
  %v1752 = vsub.f32 1.0, %v1751
  %v1753 = vmul.f32 %v1750, %v1752
  %v1754 = vadd.f32 %v1750, %v1753
  %vm1755 = vweird.f32 %v1749
  %vm1756 = vweird.f32 %v1750
  %vm1757 = vmor %vm1755, %vm1756
  %v1758 = vsel %vm1757, %v1750, %v1754
  %v1759 = vand.u32 2147483647, %v1749
  %vm1760 = vcmp.eq.f32.partialorder %v1759, 8.507059e+37
  %v1761 = vand.u32 %v1749, 2147483648
  %v1762 = vor.u32 1.1754944e-38, %v1761
  %v1763 = vsel %vm1760, %v1762, %v1758
  %v1764 = vmul.f32 1.0, %v1763
  %1765 = vrot.lane.b32.xlu0 %v1743, 64
  %v1766 = vpop.permute.xlu0 %1765
  %v1768 = vmul.f32 %v1764, %v1766
  %1770 = vrot.lane.b32.xlu0 %v1768, 64
  %v1771 = vpop.permute.xlu0 %1770
  %v1773 = vadd.f32 %v1254, %v1771
  %v1774 = vtanh.pop %v1773
  %v1775 = vsub.f32 1.0, %v1764
  %1777 = vrot.lane.b32.xlu0 %v1774, 96
  %v1778 = vpop.permute.xlu0 %1777
  %v1780 = vmul.f32 %v1775, %v1778
  %v1781 = vrot.slane %v1718, 4
  %1782 = vrot.lane.b32.xlu0 %v1781, 32
  %v1783 = vpop.permute.xlu0 %1782
  %v1785 = vmul.f32 %v1764, %v1783
  %v1786 = vadd.f32 %v1780, %v1785
  %vm1787 = vcmp.gt.s32.totalorder %v1226, 6
  %v1788 = vsel %vm1787, 1, 0
  %1789 = vset.pattern.permute.xlu0 0
  %1790 = vperm.xlu0 %1789, %v1788
  %v1791 = vpop.permute.xlu0 %1790
  %vm1792 = vcmp.eq.s32.totalorder %v1791, 1
  %v1794 = vrot.slane %v1786, 4
  %1795 = vrot.lane.b32.xlu0 %v1794, 96
  %v1796 = vpop.permute.xlu0 %1795
  %v1798 = vsel %vm1792, %v1796, %v1718
  %v1800 = vsel %vm39, %v1798, 0
  %1802 = vmatpush.msra.mxu0 0.0
  %1803 = vmatpush.msra.mxu0 0.0
  %1804 = vmatpush.msra.mxu0 0.0
  %1805 = vmatpush.msra.mxu0 0.0
  %1806 = vmatpush.msra.mxu0 0.0
  %1807 = vmatpush.msra.mxu0 0.0
  %1808 = vmatpush.msra.mxu0 0.0
  %1809 = vmatpush.msra.mxu0 0.0
  %1810 = vmatpush.msra.mxu0 0.0
  %1811 = vmatpush.msra.mxu0 0.0
  %1812 = vmatpush.msra.mxu0 0.0
  %1813 = vmatpush.msra.mxu0 0.0
  %1814 = vmatpush.msra.mxu0 %v1225
  %1815 = vmatpush.msra.mxu0 %v1224
  %1816 = vmatpush.msra.mxu0 %v1223
  %1817 = vmatpush.msra.mxu0 %v1222
  %1818 = vmatmul.f32.gmra.mxu0 %v1800
  %v1819 = vpop.f32.mrf.mxu0
  %v1820 = vadd.f32 0.0, %v1819
  %1821 = vdwg.mxu0
  %v1823 = vrot.slane %v1820, 2
  %v1825 = vadd.f32 %v1254, %v1823
  %v1826 = vxor.u32 %v1825, 2147483648
  %v1827 = vmul.f32 %v1826, 1.442695
  %v1828 = vpow.pop %v1827
  %v1829 = vadd.f32 %v1828, 1.0
  %v1830 = vrcp.pop %v1829
  %v1831 = vmul.f32 %v1829, %v1830
  %v1832 = vsub.f32 1.0, %v1831
  %v1833 = vmul.f32 %v1830, %v1832
  %v1834 = vadd.f32 %v1830, %v1833
  %vm1835 = vweird.f32 %v1829
  %vm1836 = vweird.f32 %v1830
  %vm1837 = vmor %vm1835, %vm1836
  %v1838 = vsel %vm1837, %v1830, %v1834
  %v1839 = vand.u32 2147483647, %v1829
  %vm1840 = vcmp.eq.f32.partialorder %v1839, 8.507059e+37
  %v1841 = vand.u32 %v1829, 2147483648
  %v1842 = vor.u32 1.1754944e-38, %v1841
  %v1843 = vsel %vm1840, %v1842, %v1838
  %v1844 = vmul.f32 1.0, %v1843
  %1845 = vrot.lane.b32.xlu0 %v1823, 64
  %v1846 = vpop.permute.xlu0 %1845
  %v1848 = vmul.f32 %v1844, %v1846
  %1850 = vrot.lane.b32.xlu0 %v1848, 64
  %v1851 = vpop.permute.xlu0 %1850
  %v1853 = vadd.f32 %v1254, %v1851
  %v1854 = vtanh.pop %v1853
  %v1855 = vsub.f32 1.0, %v1844
  %1857 = vrot.lane.b32.xlu0 %v1854, 96
  %v1858 = vpop.permute.xlu0 %1857
  %v1860 = vmul.f32 %v1855, %v1858
  %v1861 = vrot.slane %v1798, 2
  %1862 = vrot.lane.b32.xlu0 %v1861, 32
  %v1863 = vpop.permute.xlu0 %1862
  %v1865 = vmul.f32 %v1844, %v1863
  %v1866 = vadd.f32 %v1860, %v1865
  %vm1867 = vcmp.gt.s32.totalorder %v1226, 7
  %v1868 = vsel %vm1867, 1, 0
  %1869 = vset.pattern.permute.xlu0 0
  %1870 = vperm.xlu0 %1869, %v1868
  %v1871 = vpop.permute.xlu0 %1870
  %vm1872 = vcmp.eq.s32.totalorder %v1871, 1
  %v1874 = vrot.slane %v1866, 6
  %1875 = vrot.lane.b32.xlu0 %v1874, 96
  %v1876 = vpop.permute.xlu0 %1875
  %v1878 = vsel %vm1872, %v1876, %v1798
  %vm1879 = vcmask 254976
  %1880 = vst.msk [vmem:[%s10] sm:$0x3] %vm1879, %v1214
  %1881 = vst.msk [vmem:[%s10 + $0x2] sm:$0x3] %vm1879, %v1878
  // Predicated region
  $region42: #{exposure_model_forward.1} parent=0 // pred_check
    _
  $region43: #{exposure_model_forward.1} parent=0 // pred_check_branch
    %1883 = sbr.rel (0) target = $region45
  $region44: #{exposure_model_forward.1} parent=0 // pred_region
    _
  $region45: #{exposure_model_forward.1} parent=0 // pred_fallthru
    _
  // Predicated region
  $region46: #{exposure_model_forward.1} parent=0 // pred_check
    _
  $region47: #{exposure_model_forward.1} parent=0 // pred_check_branch
    %1885 = sbr.rel (0) target = $region49
  $region48: #{exposure_model_forward.1} parent=0 // pred_region
    _
  $region49: #{exposure_model_forward.1} parent=0 // pred_fallthru
    _

</llo_original>
